<compile_context>
chip_gen: v6e
topology: v6e:2x2x1
jax: 0.10.0
libtpu: 0.0.40
codegen_flags: <defaults>
</compile_context>

<pallas_src>
import jax
import jax.numpy as jnp
from jax import lax
from jax.experimental import pallas as pl
from jax.experimental.pallas import tpu as pltpu
import numpy as np


def lstm_tagger_kernel(x_ref,                 # VMEM (S, E)   gathered embedding rows
                       w_ih0_ref, w_hh0_ref, b0_ref,   # (E,4H), (H,4H), (1,4H)
                       w_ih1_ref, w_hh1_ref, b1_ref,   # (H,4H), (H,4H), (1,4H)
                       w_out_ref, b_out_ref,           # (H,C), (1,C)
                       out_ref,               # VMEM (S, C)   log-probabilities
                       xproj_ref,             # VMEM scratch (S, 4H)
                       h2_ref):               # VMEM scratch (S, H)
    H = w_hh0_ref.shape[0]
    S = out_ref.shape[0]

    # ---- Prologue: hoisted layer-0 input projection (one M=S matmul) ----------
    xproj_ref[...] = (
        jnp.dot(x_ref[...], w_ih0_ref[...], preferred_element_type=jnp.float32)
        + b0_ref[...])

    # Load loop-invariant weights once.
    w_hh0 = w_hh0_ref[...]
    w_ih1 = w_ih1_ref[...]
    w_hh1 = w_hh1_ref[...]
    b1 = b1_ref[...]

    def gate_math(gates, c):
        # Full-vreg transcendentals: 2 EUP dispatches, then static 32-lane slices.
        s = jax.nn.sigmoid(gates)
        tg = jnp.tanh(gates)
        i = s[:, 0 * H:1 * H]
        f = s[:, 1 * H:2 * H]
        g = tg[:, 2 * H:3 * H]
        o = s[:, 3 * H:4 * H]
        c_new = f * c + i * g
        h_new = o * jnp.tanh(c_new)
        return h_new, c_new

    zeros = jnp.zeros((1, H), jnp.float32)
    h1, c1, h2, c2 = zeros, zeros, zeros, zeros

    # ---- Recurrence, fully unrolled (S static & tiny -> no live-range issue) ---
    for t in range(S):
        # layer 0: only the recurrent dot is left on the serial chain
        g0 = (xproj_ref[pl.ds(t, 1), :]
              + jnp.dot(h1, w_hh0, preferred_element_type=jnp.float32))
        h1, c1 = gate_math(g0, c1)
        # layer 1 (h2 dot depends only on previous step -> overlaps under unroll)
        g1 = (jnp.dot(h1, w_ih1, preferred_element_type=jnp.float32)
              + jnp.dot(h2, w_hh1, preferred_element_type=jnp.float32)
              + b1)
        h2, c2 = gate_math(g1, c2)
        h2_ref[pl.ds(t, 1), :] = h2

    # ---- Epilogue: batched output projection + log-softmax, single store ------
    logits = (jnp.dot(h2_ref[...], w_out_ref[...], preferred_element_type=jnp.float32)
              + b_out_ref[...])                              # (S, C)
    m = jnp.max(logits, axis=1, keepdims=True)
    lse = m + jnp.log(jnp.sum(jnp.exp(logits - m), axis=1, keepdims=True))
    out_ref[...] = logits - lse


def lstm_tagger_pallas(ids, emb, params, n_classes):
    (w_ih0_T, w_hh0_T, b0, w_ih1_T, w_hh1_T, b1, w_out_T, b_out) = params
    seq = ids.shape[0]
    H = w_hh0_T.shape[0]

    # Validate/clamp ids outside the kernel (no runtime bounds check inside).
    ids = jnp.clip(ids.astype(jnp.int32), 0, emb.shape[0] - 1)
    # Embedding gather as glue JAX: only the S needed rows go to VMEM.
    x_rows = jnp.take(emb, ids, axis=0)                      # (S, E) float32

    # NOTE: for v6e/v7x the weights could be stored as bf16 (MXU-native) with
    # f32 accumulation; kept f32 here for exact parity with the f32 reference.
    return pl.pallas_call(
        lstm_tagger_kernel,
        out_shape=jax.ShapeDtypeStruct((seq, n_classes), jnp.float32),
        in_specs=[pl.BlockSpec(memory_space=pltpu.MemorySpace.VMEM)] * 9,
        out_specs=pl.BlockSpec(memory_space=pltpu.MemorySpace.VMEM),
        scratch_shapes=[
            pltpu.VMEM((seq, 4 * H), jnp.float32),   # hoisted layer-0 input projection
            pltpu.VMEM((seq, H), jnp.float32),       # per-step h2 accumulation
        ],
    )(x_rows, w_ih0_T, w_hh0_T, b0, w_ih1_T, w_hh1_T, b1, w_out_T, b_out)


def reference_jax(ids, emb, params, n_classes):
    """Pure-JAX reference mirroring torch semantics (zero initial state, gate order i,f,g,o)."""
    (w_ih0_T, w_hh0_T, b0, w_ih1_T, w_hh1_T, b1, w_out_T, b_out) = params
    H = w_hh0_T.shape[0]

    def cell(x, h, c, w_ih_T, w_hh_T, b):
        g = x @ w_ih_T + h @ w_hh_T + b
        i, f, gg, o = (jax.nn.sigmoid(g[:, :H]), jax.nn.sigmoid(g[:, H:2 * H]),
                       jnp.tanh(g[:, 2 * H:3 * H]), jax.nn.sigmoid(g[:, 3 * H:]))
        c = f * c + i * gg
        return o * jnp.tanh(c), c

    def step(carry, tok):
        h1, c1, h2, c2 = carry
        x = emb[tok][None, :]
        h1, c1 = cell(x, h1, c1, w_ih0_T, w_hh0_T, b0)
        h2, c2 = cell(h1, h2, c2, w_ih1_T, w_hh1_T, b1)
        logits = h2 @ w_out_T + b_out
        return (h1, c1, h2, c2), jax.nn.log_softmax(logits[0], axis=-1)

    z = jnp.zeros((1, H), jnp.float32)
    _, out = lax.scan(step, (z, z, z, z), ids)
    return out


if __name__ == "__main__":
    # Small synthetic sizes consistent with the module.
    VOCAB, EMB, HIDDEN, N_CLASSES, SEQ = 64, 32, 32, 8, 8

    key = jax.random.PRNGKey(0)
    ks = jax.random.split(key, 12)
    bound = 1.0 / np.sqrt(HIDDEN)

    emb_table = jax.random.normal(ks[0], (VOCAB, EMB), jnp.float32)

    def u(k, shape):
        return jax.random.uniform(k, shape, jnp.float32, -bound, bound)

    # torch.nn.LSTM layer 0: weight_ih_l0 (4H,E), weight_hh_l0 (4H,H), biases (4H,)
    w_ih0 = u(ks[1], (4 * HIDDEN, EMB))
    w_hh0 = u(ks[2], (4 * HIDDEN, HIDDEN))
    b0 = (u(ks[3], (4 * HIDDEN,)) + u(ks[4], (4 * HIDDEN,)))  # b_ih + b_hh pre-summed
    # layer 1
    w_ih1 = u(ks[5], (4 * HIDDEN, HIDDEN))
    w_hh1 = u(ks[6], (4 * HIDDEN, HIDDEN))
    b1 = (u(ks[7], (4 * HIDDEN,)) + u(ks[8], (4 * HIDDEN,)))
    # hidden2tag: Linear(H, C)
    w_out = u(ks[9], (N_CLASSES, HIDDEN))
    b_out = u(ks[10], (N_CLASSES,))

    params = (
        w_ih0.T, w_hh0.T, b0[None, :],
        w_ih1.T, w_hh1.T, b1[None, :],
        w_out.T, b_out[None, :],
    )

    ids = jax.random.randint(ks[11], (SEQ,), 0, VOCAB, dtype=jnp.int32)

    out = lstm_tagger_pallas(ids, emb_table, params, N_CLASSES)
    out = jax.block_until_ready(out)

    ref = jax.block_until_ready(reference_jax(ids, emb_table, params, N_CLASSES))
    np.testing.assert_allclose(np.asarray(out), np.asarray(ref), rtol=1e-4, atol=1e-4)

    print("KERNEL_OK")
</pallas_src>

<mosaic_0001>
module attributes {stable_mosaic.version = 11 : i64} {
  func.func @lstm_tagger_kernel(%arg0: memref<8x32xf32, #tpu.memory_space<vmem>>, %arg1: memref<32x128xf32, #tpu.memory_space<vmem>>, %arg2: memref<32x128xf32, #tpu.memory_space<vmem>>, %arg3: memref<1x128xf32, #tpu.memory_space<vmem>>, %arg4: memref<32x128xf32, #tpu.memory_space<vmem>>, %arg5: memref<32x128xf32, #tpu.memory_space<vmem>>, %arg6: memref<1x128xf32, #tpu.memory_space<vmem>>, %arg7: memref<32x8xf32, #tpu.memory_space<vmem>>, %arg8: memref<1x8xf32, #tpu.memory_space<vmem>>, %arg9: memref<8x8xf32, #tpu.memory_space<vmem>>, %arg10: memref<8x128xf32, #tpu.memory_space<vmem>>, %arg11: memref<8x32xf32, #tpu.memory_space<vmem>>) attributes {dimension_semantics = [], scalar_prefetch = 0 : i64, scratch_operands = 2 : i64, tpu.core_type = #tpu.core_type<tc>} {
    %c0 = arith.constant 0 : index
    %c0_0 = arith.constant 0 : index
    %0 = vector.load %arg0[%c0, %c0_0] : memref<8x32xf32, #tpu.memory_space<vmem>>, vector<8x32xf32>
    %c0_1 = arith.constant 0 : index
    %c0_2 = arith.constant 0 : index
    %1 = vector.load %arg1[%c0_1, %c0_2] : memref<32x128xf32, #tpu.memory_space<vmem>>, vector<32x128xf32>
    %cst = arith.constant dense<0.000000e+00> : vector<8x128xf32>
    %2 = tpu.matmul %0, %1, %cst {dimension_numbers = #tpu.dot_dimension_numbers<[1], [0], [0], [1], [0, 0, 1, 1], [], []>} : vector<8x32xf32>, vector<32x128xf32>, vector<8x128xf32> -> vector<8x128xf32>
    %c0_3 = arith.constant 0 : index
    %c0_4 = arith.constant 0 : index
    %3 = vector.load %arg3[%c0_3, %c0_4] : memref<1x128xf32, #tpu.memory_space<vmem>>, vector<1x128xf32>
    %4 = vector.broadcast %3 : vector<1x128xf32> to vector<8x128xf32>
    %5 = arith.addf %2, %4 : vector<8x128xf32>
    %c0_5 = arith.constant 0 : index
    %c0_6 = arith.constant 0 : index
    %6 = vector.load %arg10[%c0_5, %c0_6] : memref<8x128xf32, #tpu.memory_space<vmem>>, vector<8x128xf32>
    tpu.vector_store %arg10[%c0_5, %c0_6], %5 {strides = array<i32>} : memref<8x128xf32, #tpu.memory_space<vmem>>, vector<8x128xf32>,
    %c0_7 = arith.constant 0 : index
    %c0_8 = arith.constant 0 : index
    %7 = vector.load %arg2[%c0_7, %c0_8] : memref<32x128xf32, #tpu.memory_space<vmem>>, vector<32x128xf32>
    %c0_9 = arith.constant 0 : index
    %c0_10 = arith.constant 0 : index
    %8 = vector.load %arg4[%c0_9, %c0_10] : memref<32x128xf32, #tpu.memory_space<vmem>>, vector<32x128xf32>
    %c0_11 = arith.constant 0 : index
    %c0_12 = arith.constant 0 : index
    %9 = vector.load %arg5[%c0_11, %c0_12] : memref<32x128xf32, #tpu.memory_space<vmem>>, vector<32x128xf32>
    %c0_13 = arith.constant 0 : index
    %c0_14 = arith.constant 0 : index
    %10 = vector.load %arg6[%c0_13, %c0_14] : memref<1x128xf32, #tpu.memory_space<vmem>>, vector<1x128xf32>
    %cst_15 = arith.constant 0.000000e+00 : f32
    %11 = vector.broadcast %cst_15 : f32 to vector<1x32xf32>
    %c0_16 = arith.constant 0 : index
    %c0_17 = arith.constant 0 : index
    %12 = vector.load %arg10[%c0_16, %c0_17] : memref<8x128xf32, #tpu.memory_space<vmem>>, vector<1x128xf32>
    %cst_18 = arith.constant dense<0.000000e+00> : vector<1x128xf32>
    %13 = tpu.matmul %11, %7, %cst_18 {dimension_numbers = #tpu.dot_dimension_numbers<[1], [0], [0], [1], [0, 0, 1, 1], [], []>} : vector<1x32xf32>, vector<32x128xf32>, vector<1x128xf32> -> vector<1x128xf32>
    %14 = arith.addf %12, %13 : vector<1x128xf32>
    %15 = arith.negf %14 : vector<1x128xf32>
    %16 = math.exp %15 : vector<1x128xf32>
    %cst_19 = arith.constant 1.000000e+00 : f32
    %17 = vector.broadcast %cst_19 : f32 to vector<1x128xf32>
    %18 = arith.addf %17, %16 : vector<1x128xf32>
    %19 = arith.divf %17, %18 : vector<1x128xf32>
    %20 = math.tanh %14 : vector<1x128xf32>
    %21 = vector.extract_strided_slice %19 {offsets = [0, 0], sizes = [1, 32], strides = [1, 1]} : vector<1x128xf32> to vector<1x32xf32>
    %22 = vector.extract_strided_slice %19 {offsets = [0, 32], sizes = [1, 32], strides = [1, 1]} : vector<1x128xf32> to vector<1x32xf32>
    %23 = vector.extract_strided_slice %20 {offsets = [0, 64], sizes = [1, 32], strides = [1, 1]} : vector<1x128xf32> to vector<1x32xf32>
    %24 = vector.extract_strided_slice %19 {offsets = [0, 96], sizes = [1, 32], strides = [1, 1]} : vector<1x128xf32> to vector<1x32xf32>
    %25 = arith.mulf %22, %11 : vector<1x32xf32>
    %26 = arith.mulf %21, %23 : vector<1x32xf32>
    %27 = arith.addf %25, %26 : vector<1x32xf32>
    %28 = math.tanh %27 : vector<1x32xf32>
    %29 = arith.mulf %24, %28 : vector<1x32xf32>
    %cst_20 = arith.constant dense<0.000000e+00> : vector<1x128xf32>
    %30 = tpu.matmul %29, %8, %cst_20 {dimension_numbers = #tpu.dot_dimension_numbers<[1], [0], [0], [1], [0, 0, 1, 1], [], []>} : vector<1x32xf32>, vector<32x128xf32>, vector<1x128xf32> -> vector<1x128xf32>
    %cst_21 = arith.constant dense<0.000000e+00> : vector<1x128xf32>
    %31 = tpu.matmul %11, %9, %cst_21 {dimension_numbers = #tpu.dot_dimension_numbers<[1], [0], [0], [1], [0, 0, 1, 1], [], []>} : vector<1x32xf32>, vector<32x128xf32>, vector<1x128xf32> -> vector<1x128xf32>
    %32 = arith.addf %30, %31 : vector<1x128xf32>
    %33 = arith.addf %32, %10 : vector<1x128xf32>
    %34 = arith.negf %33 : vector<1x128xf32>
    %35 = math.exp %34 : vector<1x128xf32>
    %cst_22 = arith.constant 1.000000e+00 : f32
    %36 = vector.broadcast %cst_22 : f32 to vector<1x128xf32>
    %37 = arith.addf %36, %35 : vector<1x128xf32>
    %38 = arith.divf %36, %37 : vector<1x128xf32>
    %39 = math.tanh %33 : vector<1x128xf32>
    %40 = vector.extract_strided_slice %38 {offsets = [0, 0], sizes = [1, 32], strides = [1, 1]} : vector<1x128xf32> to vector<1x32xf32>
    %41 = vector.extract_strided_slice %38 {offsets = [0, 32], sizes = [1, 32], strides = [1, 1]} : vector<1x128xf32> to vector<1x32xf32>
    %42 = vector.extract_strided_slice %39 {offsets = [0, 64], sizes = [1, 32], strides = [1, 1]} : vector<1x128xf32> to vector<1x32xf32>
    %43 = vector.extract_strided_slice %38 {offsets = [0, 96], sizes = [1, 32], strides = [1, 1]} : vector<1x128xf32> to vector<1x32xf32>
    %44 = arith.mulf %41, %11 : vector<1x32xf32>
    %45 = arith.mulf %40, %42 : vector<1x32xf32>
    %46 = arith.addf %44, %45 : vector<1x32xf32>
    %47 = math.tanh %46 : vector<1x32xf32>
    %48 = arith.mulf %43, %47 : vector<1x32xf32>
    %c0_23 = arith.constant 0 : index
    %c0_24 = arith.constant 0 : index
    %49 = vector.load %arg11[%c0_23, %c0_24] : memref<8x32xf32, #tpu.memory_space<vmem>>, vector<1x32xf32>
    tpu.vector_store %arg11[%c0_23, %c0_24], %48 {strides = array<i32>} : memref<8x32xf32, #tpu.memory_space<vmem>>, vector<1x32xf32>,
    %c1 = arith.constant 1 : index
    %c0_25 = arith.constant 0 : index
    %50 = vector.load %arg10[%c1, %c0_25] : memref<8x128xf32, #tpu.memory_space<vmem>>, vector<1x128xf32>
    %cst_26 = arith.constant dense<0.000000e+00> : vector<1x128xf32>
    %51 = tpu.matmul %29, %7, %cst_26 {dimension_numbers = #tpu.dot_dimension_numbers<[1], [0], [0], [1], [0, 0, 1, 1], [], []>} : vector<1x32xf32>, vector<32x128xf32>, vector<1x128xf32> -> vector<1x128xf32>
    %52 = arith.addf %50, %51 : vector<1x128xf32>
    %53 = arith.negf %52 : vector<1x128xf32>
    %54 = math.exp %53 : vector<1x128xf32>
    %cst_27 = arith.constant 1.000000e+00 : f32
    %55 = vector.broadcast %cst_27 : f32 to vector<1x128xf32>
    %56 = arith.addf %55, %54 : vector<1x128xf32>
    %57 = arith.divf %55, %56 : vector<1x128xf32>
    %58 = math.tanh %52 : vector<1x128xf32>
    %59 = vector.extract_strided_slice %57 {offsets = [0, 0], sizes = [1, 32], strides = [1, 1]} : vector<1x128xf32> to vector<1x32xf32>
    %60 = vector.extract_strided_slice %57 {offsets = [0, 32], sizes = [1, 32], strides = [1, 1]} : vector<1x128xf32> to vector<1x32xf32>
    %61 = vector.extract_strided_slice %58 {offsets = [0, 64], sizes = [1, 32], strides = [1, 1]} : vector<1x128xf32> to vector<1x32xf32>
    %62 = vector.extract_strided_slice %57 {offsets = [0, 96], sizes = [1, 32], strides = [1, 1]} : vector<1x128xf32> to vector<1x32xf32>
    %63 = arith.mulf %60, %27 : vector<1x32xf32>
    %64 = arith.mulf %59, %61 : vector<1x32xf32>
    %65 = arith.addf %63, %64 : vector<1x32xf32>
    %66 = math.tanh %65 : vector<1x32xf32>
    %67 = arith.mulf %62, %66 : vector<1x32xf32>
    %cst_28 = arith.constant dense<0.000000e+00> : vector<1x128xf32>
    %68 = tpu.matmul %67, %8, %cst_28 {dimension_numbers = #tpu.dot_dimension_numbers<[1], [0], [0], [1], [0, 0, 1, 1], [], []>} : vector<1x32xf32>, vector<32x128xf32>, vector<1x128xf32> -> vector<1x128xf32>
    %cst_29 = arith.constant dense<0.000000e+00> : vector<1x128xf32>
    %69 = tpu.matmul %48, %9, %cst_29 {dimension_numbers = #tpu.dot_dimension_numbers<[1], [0], [0], [1], [0, 0, 1, 1], [], []>} : vector<1x32xf32>, vector<32x128xf32>, vector<1x128xf32> -> vector<1x128xf32>
    %70 = arith.addf %68, %69 : vector<1x128xf32>
    %71 = arith.addf %70, %10 : vector<1x128xf32>
    %72 = arith.negf %71 : vector<1x128xf32>
    %73 = math.exp %72 : vector<1x128xf32>
    %cst_30 = arith.constant 1.000000e+00 : f32
    %74 = vector.broadcast %cst_30 : f32 to vector<1x128xf32>
    %75 = arith.addf %74, %73 : vector<1x128xf32>
    %76 = arith.divf %74, %75 : vector<1x128xf32>
    %77 = math.tanh %71 : vector<1x128xf32>
    %78 = vector.extract_strided_slice %76 {offsets = [0, 0], sizes = [1, 32], strides = [1, 1]} : vector<1x128xf32> to vector<1x32xf32>
    %79 = vector.extract_strided_slice %76 {offsets = [0, 32], sizes = [1, 32], strides = [1, 1]} : vector<1x128xf32> to vector<1x32xf32>
    %80 = vector.extract_strided_slice %77 {offsets = [0, 64], sizes = [1, 32], strides = [1, 1]} : vector<1x128xf32> to vector<1x32xf32>
    %81 = vector.extract_strided_slice %76 {offsets = [0, 96], sizes = [1, 32], strides = [1, 1]} : vector<1x128xf32> to vector<1x32xf32>
    %82 = arith.mulf %79, %46 : vector<1x32xf32>
    %83 = arith.mulf %78, %80 : vector<1x32xf32>
    %84 = arith.addf %82, %83 : vector<1x32xf32>
    %85 = math.tanh %84 : vector<1x32xf32>
    %86 = arith.mulf %81, %85 : vector<1x32xf32>
    %c1_31 = arith.constant 1 : index
    %c0_32 = arith.constant 0 : index
    %87 = vector.load %arg11[%c1_31, %c0_32] : memref<8x32xf32, #tpu.memory_space<vmem>>, vector<1x32xf32>
    tpu.vector_store %arg11[%c1_31, %c0_32], %86 {strides = array<i32>} : memref<8x32xf32, #tpu.memory_space<vmem>>, vector<1x32xf32>,
    %c2 = arith.constant 2 : index
    %c0_33 = arith.constant 0 : index
    %88 = vector.load %arg10[%c2, %c0_33] : memref<8x128xf32, #tpu.memory_space<vmem>>, vector<1x128xf32>
    %cst_34 = arith.constant dense<0.000000e+00> : vector<1x128xf32>
    %89 = tpu.matmul %67, %7, %cst_34 {dimension_numbers = #tpu.dot_dimension_numbers<[1], [0], [0], [1], [0, 0, 1, 1], [], []>} : vector<1x32xf32>, vector<32x128xf32>, vector<1x128xf32> -> vector<1x128xf32>
    %90 = arith.addf %88, %89 : vector<1x128xf32>
    %91 = arith.negf %90 : vector<1x128xf32>
    %92 = math.exp %91 : vector<1x128xf32>
    %cst_35 = arith.constant 1.000000e+00 : f32
    %93 = vector.broadcast %cst_35 : f32 to vector<1x128xf32>
    %94 = arith.addf %93, %92 : vector<1x128xf32>
    %95 = arith.divf %93, %94 : vector<1x128xf32>
    %96 = math.tanh %90 : vector<1x128xf32>
    %97 = vector.extract_strided_slice %95 {offsets = [0, 0], sizes = [1, 32], strides = [1, 1]} : vector<1x128xf32> to vector<1x32xf32>
    %98 = vector.extract_strided_slice %95 {offsets = [0, 32], sizes = [1, 32], strides = [1, 1]} : vector<1x128xf32> to vector<1x32xf32>
    %99 = vector.extract_strided_slice %96 {offsets = [0, 64], sizes = [1, 32], strides = [1, 1]} : vector<1x128xf32> to vector<1x32xf32>
    %100 = vector.extract_strided_slice %95 {offsets = [0, 96], sizes = [1, 32], strides = [1, 1]} : vector<1x128xf32> to vector<1x32xf32>
    %101 = arith.mulf %98, %65 : vector<1x32xf32>
    %102 = arith.mulf %97, %99 : vector<1x32xf32>
    %103 = arith.addf %101, %102 : vector<1x32xf32>
    %104 = math.tanh %103 : vector<1x32xf32>
    %105 = arith.mulf %100, %104 : vector<1x32xf32>
    %cst_36 = arith.constant dense<0.000000e+00> : vector<1x128xf32>
    %106 = tpu.matmul %105, %8, %cst_36 {dimension_numbers = #tpu.dot_dimension_numbers<[1], [0], [0], [1], [0, 0, 1, 1], [], []>} : vector<1x32xf32>, vector<32x128xf32>, vector<1x128xf32> -> vector<1x128xf32>
    %cst_37 = arith.constant dense<0.000000e+00> : vector<1x128xf32>
    %107 = tpu.matmul %86, %9, %cst_37 {dimension_numbers = #tpu.dot_dimension_numbers<[1], [0], [0], [1], [0, 0, 1, 1], [], []>} : vector<1x32xf32>, vector<32x128xf32>, vector<1x128xf32> -> vector<1x128xf32>
    %108 = arith.addf %106, %107 : vector<1x128xf32>
    %109 = arith.addf %108, %10 : vector<1x128xf32>
    %110 = arith.negf %109 : vector<1x128xf32>
    %111 = math.exp %110 : vector<1x128xf32>
    %cst_38 = arith.constant 1.000000e+00 : f32
    %112 = vector.broadcast %cst_38 : f32 to vector<1x128xf32>
    %113 = arith.addf %112, %111 : vector<1x128xf32>
    %114 = arith.divf %112, %113 : vector<1x128xf32>
    %115 = math.tanh %109 : vector<1x128xf32>
    %116 = vector.extract_strided_slice %114 {offsets = [0, 0], sizes = [1, 32], strides = [1, 1]} : vector<1x128xf32> to vector<1x32xf32>
    %117 = vector.extract_strided_slice %114 {offsets = [0, 32], sizes = [1, 32], strides = [1, 1]} : vector<1x128xf32> to vector<1x32xf32>
    %118 = vector.extract_strided_slice %115 {offsets = [0, 64], sizes = [1, 32], strides = [1, 1]} : vector<1x128xf32> to vector<1x32xf32>
    %119 = vector.extract_strided_slice %114 {offsets = [0, 96], sizes = [1, 32], strides = [1, 1]} : vector<1x128xf32> to vector<1x32xf32>
    %120 = arith.mulf %117, %84 : vector<1x32xf32>
    %121 = arith.mulf %116, %118 : vector<1x32xf32>
    %122 = arith.addf %120, %121 : vector<1x32xf32>
    %123 = math.tanh %122 : vector<1x32xf32>
    %124 = arith.mulf %119, %123 : vector<1x32xf32>
    %c2_39 = arith.constant 2 : index
    %c0_40 = arith.constant 0 : index
    %125 = vector.load %arg11[%c2_39, %c0_40] : memref<8x32xf32, #tpu.memory_space<vmem>>, vector<1x32xf32>
    tpu.vector_store %arg11[%c2_39, %c0_40], %124 {strides = array<i32>} : memref<8x32xf32, #tpu.memory_space<vmem>>, vector<1x32xf32>,
    %c3 = arith.constant 3 : index
    %c0_41 = arith.constant 0 : index
    %126 = vector.load %arg10[%c3, %c0_41] : memref<8x128xf32, #tpu.memory_space<vmem>>, vector<1x128xf32>
    %cst_42 = arith.constant dense<0.000000e+00> : vector<1x128xf32>
    %127 = tpu.matmul %105, %7, %cst_42 {dimension_numbers = #tpu.dot_dimension_numbers<[1], [0], [0], [1], [0, 0, 1, 1], [], []>} : vector<1x32xf32>, vector<32x128xf32>, vector<1x128xf32> -> vector<1x128xf32>
    %128 = arith.addf %126, %127 : vector<1x128xf32>
    %129 = arith.negf %128 : vector<1x128xf32>
    %130 = math.exp %129 : vector<1x128xf32>
    %cst_43 = arith.constant 1.000000e+00 : f32
    %131 = vector.broadcast %cst_43 : f32 to vector<1x128xf32>
    %132 = arith.addf %131, %130 : vector<1x128xf32>
    %133 = arith.divf %131, %132 : vector<1x128xf32>
    %134 = math.tanh %128 : vector<1x128xf32>
    %135 = vector.extract_strided_slice %133 {offsets = [0, 0], sizes = [1, 32], strides = [1, 1]} : vector<1x128xf32> to vector<1x32xf32>
    %136 = vector.extract_strided_slice %133 {offsets = [0, 32], sizes = [1, 32], strides = [1, 1]} : vector<1x128xf32> to vector<1x32xf32>
    %137 = vector.extract_strided_slice %134 {offsets = [0, 64], sizes = [1, 32], strides = [1, 1]} : vector<1x128xf32> to vector<1x32xf32>
    %138 = vector.extract_strided_slice %133 {offsets = [0, 96], sizes = [1, 32], strides = [1, 1]} : vector<1x128xf32> to vector<1x32xf32>
    %139 = arith.mulf %136, %103 : vector<1x32xf32>
    %140 = arith.mulf %135, %137 : vector<1x32xf32>
    %141 = arith.addf %139, %140 : vector<1x32xf32>
    %142 = math.tanh %141 : vector<1x32xf32>
    %143 = arith.mulf %138, %142 : vector<1x32xf32>
    %cst_44 = arith.constant dense<0.000000e+00> : vector<1x128xf32>
    %144 = tpu.matmul %143, %8, %cst_44 {dimension_numbers = #tpu.dot_dimension_numbers<[1], [0], [0], [1], [0, 0, 1, 1], [], []>} : vector<1x32xf32>, vector<32x128xf32>, vector<1x128xf32> -> vector<1x128xf32>
    %cst_45 = arith.constant dense<0.000000e+00> : vector<1x128xf32>
    %145 = tpu.matmul %124, %9, %cst_45 {dimension_numbers = #tpu.dot_dimension_numbers<[1], [0], [0], [1], [0, 0, 1, 1], [], []>} : vector<1x32xf32>, vector<32x128xf32>, vector<1x128xf32> -> vector<1x128xf32>
    %146 = arith.addf %144, %145 : vector<1x128xf32>
    %147 = arith.addf %146, %10 : vector<1x128xf32>
    %148 = arith.negf %147 : vector<1x128xf32>
    %149 = math.exp %148 : vector<1x128xf32>
    %cst_46 = arith.constant 1.000000e+00 : f32
    %150 = vector.broadcast %cst_46 : f32 to vector<1x128xf32>
    %151 = arith.addf %150, %149 : vector<1x128xf32>
    %152 = arith.divf %150, %151 : vector<1x128xf32>
    %153 = math.tanh %147 : vector<1x128xf32>
    %154 = vector.extract_strided_slice %152 {offsets = [0, 0], sizes = [1, 32], strides = [1, 1]} : vector<1x128xf32> to vector<1x32xf32>
    %155 = vector.extract_strided_slice %152 {offsets = [0, 32], sizes = [1, 32], strides = [1, 1]} : vector<1x128xf32> to vector<1x32xf32>
    %156 = vector.extract_strided_slice %153 {offsets = [0, 64], sizes = [1, 32], strides = [1, 1]} : vector<1x128xf32> to vector<1x32xf32>
    %157 = vector.extract_strided_slice %152 {offsets = [0, 96], sizes = [1, 32], strides = [1, 1]} : vector<1x128xf32> to vector<1x32xf32>
    %158 = arith.mulf %155, %122 : vector<1x32xf32>
    %159 = arith.mulf %154, %156 : vector<1x32xf32>
    %160 = arith.addf %158, %159 : vector<1x32xf32>
    %161 = math.tanh %160 : vector<1x32xf32>
    %162 = arith.mulf %157, %161 : vector<1x32xf32>
    %c3_47 = arith.constant 3 : index
    %c0_48 = arith.constant 0 : index
    %163 = vector.load %arg11[%c3_47, %c0_48] : memref<8x32xf32, #tpu.memory_space<vmem>>, vector<1x32xf32>
    tpu.vector_store %arg11[%c3_47, %c0_48], %162 {strides = array<i32>} : memref<8x32xf32, #tpu.memory_space<vmem>>, vector<1x32xf32>,
    %c4 = arith.constant 4 : index
    %c0_49 = arith.constant 0 : index
    %164 = vector.load %arg10[%c4, %c0_49] : memref<8x128xf32, #tpu.memory_space<vmem>>, vector<1x128xf32>
    %cst_50 = arith.constant dense<0.000000e+00> : vector<1x128xf32>
    %165 = tpu.matmul %143, %7, %cst_50 {dimension_numbers = #tpu.dot_dimension_numbers<[1], [0], [0], [1], [0, 0, 1, 1], [], []>} : vector<1x32xf32>, vector<32x128xf32>, vector<1x128xf32> -> vector<1x128xf32>
    %166 = arith.addf %164, %165 : vector<1x128xf32>
    %167 = arith.negf %166 : vector<1x128xf32>
    %168 = math.exp %167 : vector<1x128xf32>
    %cst_51 = arith.constant 1.000000e+00 : f32
    %169 = vector.broadcast %cst_51 : f32 to vector<1x128xf32>
    %170 = arith.addf %169, %168 : vector<1x128xf32>
    %171 = arith.divf %169, %170 : vector<1x128xf32>
    %172 = math.tanh %166 : vector<1x128xf32>
    %173 = vector.extract_strided_slice %171 {offsets = [0, 0], sizes = [1, 32], strides = [1, 1]} : vector<1x128xf32> to vector<1x32xf32>
    %174 = vector.extract_strided_slice %171 {offsets = [0, 32], sizes = [1, 32], strides = [1, 1]} : vector<1x128xf32> to vector<1x32xf32>
    %175 = vector.extract_strided_slice %172 {offsets = [0, 64], sizes = [1, 32], strides = [1, 1]} : vector<1x128xf32> to vector<1x32xf32>
    %176 = vector.extract_strided_slice %171 {offsets = [0, 96], sizes = [1, 32], strides = [1, 1]} : vector<1x128xf32> to vector<1x32xf32>
    %177 = arith.mulf %174, %141 : vector<1x32xf32>
    %178 = arith.mulf %173, %175 : vector<1x32xf32>
    %179 = arith.addf %177, %178 : vector<1x32xf32>
    %180 = math.tanh %179 : vector<1x32xf32>
    %181 = arith.mulf %176, %180 : vector<1x32xf32>
    %cst_52 = arith.constant dense<0.000000e+00> : vector<1x128xf32>
    %182 = tpu.matmul %181, %8, %cst_52 {dimension_numbers = #tpu.dot_dimension_numbers<[1], [0], [0], [1], [0, 0, 1, 1], [], []>} : vector<1x32xf32>, vector<32x128xf32>, vector<1x128xf32> -> vector<1x128xf32>
    %cst_53 = arith.constant dense<0.000000e+00> : vector<1x128xf32>
    %183 = tpu.matmul %162, %9, %cst_53 {dimension_numbers = #tpu.dot_dimension_numbers<[1], [0], [0], [1], [0, 0, 1, 1], [], []>} : vector<1x32xf32>, vector<32x128xf32>, vector<1x128xf32> -> vector<1x128xf32>
    %184 = arith.addf %182, %183 : vector<1x128xf32>
    %185 = arith.addf %184, %10 : vector<1x128xf32>
    %186 = arith.negf %185 : vector<1x128xf32>
    %187 = math.exp %186 : vector<1x128xf32>
    %cst_54 = arith.constant 1.000000e+00 : f32
    %188 = vector.broadcast %cst_54 : f32 to vector<1x128xf32>
    %189 = arith.addf %188, %187 : vector<1x128xf32>
    %190 = arith.divf %188, %189 : vector<1x128xf32>
    %191 = math.tanh %185 : vector<1x128xf32>
    %192 = vector.extract_strided_slice %190 {offsets = [0, 0], sizes = [1, 32], strides = [1, 1]} : vector<1x128xf32> to vector<1x32xf32>
    %193 = vector.extract_strided_slice %190 {offsets = [0, 32], sizes = [1, 32], strides = [1, 1]} : vector<1x128xf32> to vector<1x32xf32>
    %194 = vector.extract_strided_slice %191 {offsets = [0, 64], sizes = [1, 32], strides = [1, 1]} : vector<1x128xf32> to vector<1x32xf32>
    %195 = vector.extract_strided_slice %190 {offsets = [0, 96], sizes = [1, 32], strides = [1, 1]} : vector<1x128xf32> to vector<1x32xf32>
    %196 = arith.mulf %193, %160 : vector<1x32xf32>
    %197 = arith.mulf %192, %194 : vector<1x32xf32>
    %198 = arith.addf %196, %197 : vector<1x32xf32>
    %199 = math.tanh %198 : vector<1x32xf32>
    %200 = arith.mulf %195, %199 : vector<1x32xf32>
    %c4_55 = arith.constant 4 : index
    %c0_56 = arith.constant 0 : index
    %201 = vector.load %arg11[%c4_55, %c0_56] : memref<8x32xf32, #tpu.memory_space<vmem>>, vector<1x32xf32>
    tpu.vector_store %arg11[%c4_55, %c0_56], %200 {strides = array<i32>} : memref<8x32xf32, #tpu.memory_space<vmem>>, vector<1x32xf32>,
    %c5 = arith.constant 5 : index
    %c0_57 = arith.constant 0 : index
    %202 = vector.load %arg10[%c5, %c0_57] : memref<8x128xf32, #tpu.memory_space<vmem>>, vector<1x128xf32>
    %cst_58 = arith.constant dense<0.000000e+00> : vector<1x128xf32>
    %203 = tpu.matmul %181, %7, %cst_58 {dimension_numbers = #tpu.dot_dimension_numbers<[1], [0], [0], [1], [0, 0, 1, 1], [], []>} : vector<1x32xf32>, vector<32x128xf32>, vector<1x128xf32> -> vector<1x128xf32>
    %204 = arith.addf %202, %203 : vector<1x128xf32>
    %205 = arith.negf %204 : vector<1x128xf32>
    %206 = math.exp %205 : vector<1x128xf32>
    %cst_59 = arith.constant 1.000000e+00 : f32
    %207 = vector.broadcast %cst_59 : f32 to vector<1x128xf32>
    %208 = arith.addf %207, %206 : vector<1x128xf32>
    %209 = arith.divf %207, %208 : vector<1x128xf32>
    %210 = math.tanh %204 : vector<1x128xf32>
    %211 = vector.extract_strided_slice %209 {offsets = [0, 0], sizes = [1, 32], strides = [1, 1]} : vector<1x128xf32> to vector<1x32xf32>
    %212 = vector.extract_strided_slice %209 {offsets = [0, 32], sizes = [1, 32], strides = [1, 1]} : vector<1x128xf32> to vector<1x32xf32>
    %213 = vector.extract_strided_slice %210 {offsets = [0, 64], sizes = [1, 32], strides = [1, 1]} : vector<1x128xf32> to vector<1x32xf32>
    %214 = vector.extract_strided_slice %209 {offsets = [0, 96], sizes = [1, 32], strides = [1, 1]} : vector<1x128xf32> to vector<1x32xf32>
    %215 = arith.mulf %212, %179 : vector<1x32xf32>
    %216 = arith.mulf %211, %213 : vector<1x32xf32>
    %217 = arith.addf %215, %216 : vector<1x32xf32>
    %218 = math.tanh %217 : vector<1x32xf32>
    %219 = arith.mulf %214, %218 : vector<1x32xf32>
    %cst_60 = arith.constant dense<0.000000e+00> : vector<1x128xf32>
    %220 = tpu.matmul %219, %8, %cst_60 {dimension_numbers = #tpu.dot_dimension_numbers<[1], [0], [0], [1], [0, 0, 1, 1], [], []>} : vector<1x32xf32>, vector<32x128xf32>, vector<1x128xf32> -> vector<1x128xf32>
    %cst_61 = arith.constant dense<0.000000e+00> : vector<1x128xf32>
    %221 = tpu.matmul %200, %9, %cst_61 {dimension_numbers = #tpu.dot_dimension_numbers<[1], [0], [0], [1], [0, 0, 1, 1], [], []>} : vector<1x32xf32>, vector<32x128xf32>, vector<1x128xf32> -> vector<1x128xf32>
    %222 = arith.addf %220, %221 : vector<1x128xf32>
    %223 = arith.addf %222, %10 : vector<1x128xf32>
    %224 = arith.negf %223 : vector<1x128xf32>
    %225 = math.exp %224 : vector<1x128xf32>
    %cst_62 = arith.constant 1.000000e+00 : f32
    %226 = vector.broadcast %cst_62 : f32 to vector<1x128xf32>
    %227 = arith.addf %226, %225 : vector<1x128xf32>
    %228 = arith.divf %226, %227 : vector<1x128xf32>
    %229 = math.tanh %223 : vector<1x128xf32>
    %230 = vector.extract_strided_slice %228 {offsets = [0, 0], sizes = [1, 32], strides = [1, 1]} : vector<1x128xf32> to vector<1x32xf32>
    %231 = vector.extract_strided_slice %228 {offsets = [0, 32], sizes = [1, 32], strides = [1, 1]} : vector<1x128xf32> to vector<1x32xf32>
    %232 = vector.extract_strided_slice %229 {offsets = [0, 64], sizes = [1, 32], strides = [1, 1]} : vector<1x128xf32> to vector<1x32xf32>
    %233 = vector.extract_strided_slice %228 {offsets = [0, 96], sizes = [1, 32], strides = [1, 1]} : vector<1x128xf32> to vector<1x32xf32>
    %234 = arith.mulf %231, %198 : vector<1x32xf32>
    %235 = arith.mulf %230, %232 : vector<1x32xf32>
    %236 = arith.addf %234, %235 : vector<1x32xf32>
    %237 = math.tanh %236 : vector<1x32xf32>
    %238 = arith.mulf %233, %237 : vector<1x32xf32>
    %c5_63 = arith.constant 5 : index
    %c0_64 = arith.constant 0 : index
    %239 = vector.load %arg11[%c5_63, %c0_64] : memref<8x32xf32, #tpu.memory_space<vmem>>, vector<1x32xf32>
    tpu.vector_store %arg11[%c5_63, %c0_64], %238 {strides = array<i32>} : memref<8x32xf32, #tpu.memory_space<vmem>>, vector<1x32xf32>,
    %c6 = arith.constant 6 : index
    %c0_65 = arith.constant 0 : index
    %240 = vector.load %arg10[%c6, %c0_65] : memref<8x128xf32, #tpu.memory_space<vmem>>, vector<1x128xf32>
    %cst_66 = arith.constant dense<0.000000e+00> : vector<1x128xf32>
    %241 = tpu.matmul %219, %7, %cst_66 {dimension_numbers = #tpu.dot_dimension_numbers<[1], [0], [0], [1], [0, 0, 1, 1], [], []>} : vector<1x32xf32>, vector<32x128xf32>, vector<1x128xf32> -> vector<1x128xf32>
    %242 = arith.addf %240, %241 : vector<1x128xf32>
    %243 = arith.negf %242 : vector<1x128xf32>
    %244 = math.exp %243 : vector<1x128xf32>
    %cst_67 = arith.constant 1.000000e+00 : f32
    %245 = vector.broadcast %cst_67 : f32 to vector<1x128xf32>
    %246 = arith.addf %245, %244 : vector<1x128xf32>
    %247 = arith.divf %245, %246 : vector<1x128xf32>
    %248 = math.tanh %242 : vector<1x128xf32>
    %249 = vector.extract_strided_slice %247 {offsets = [0, 0], sizes = [1, 32], strides = [1, 1]} : vector<1x128xf32> to vector<1x32xf32>
    %250 = vector.extract_strided_slice %247 {offsets = [0, 32], sizes = [1, 32], strides = [1, 1]} : vector<1x128xf32> to vector<1x32xf32>
    %251 = vector.extract_strided_slice %248 {offsets = [0, 64], sizes = [1, 32], strides = [1, 1]} : vector<1x128xf32> to vector<1x32xf32>
    %252 = vector.extract_strided_slice %247 {offsets = [0, 96], sizes = [1, 32], strides = [1, 1]} : vector<1x128xf32> to vector<1x32xf32>
    %253 = arith.mulf %250, %217 : vector<1x32xf32>
    %254 = arith.mulf %249, %251 : vector<1x32xf32>
    %255 = arith.addf %253, %254 : vector<1x32xf32>
    %256 = math.tanh %255 : vector<1x32xf32>
    %257 = arith.mulf %252, %256 : vector<1x32xf32>
    %cst_68 = arith.constant dense<0.000000e+00> : vector<1x128xf32>
    %258 = tpu.matmul %257, %8, %cst_68 {dimension_numbers = #tpu.dot_dimension_numbers<[1], [0], [0], [1], [0, 0, 1, 1], [], []>} : vector<1x32xf32>, vector<32x128xf32>, vector<1x128xf32> -> vector<1x128xf32>
    %cst_69 = arith.constant dense<0.000000e+00> : vector<1x128xf32>
    %259 = tpu.matmul %238, %9, %cst_69 {dimension_numbers = #tpu.dot_dimension_numbers<[1], [0], [0], [1], [0, 0, 1, 1], [], []>} : vector<1x32xf32>, vector<32x128xf32>, vector<1x128xf32> -> vector<1x128xf32>
    %260 = arith.addf %258, %259 : vector<1x128xf32>
    %261 = arith.addf %260, %10 : vector<1x128xf32>
    %262 = arith.negf %261 : vector<1x128xf32>
    %263 = math.exp %262 : vector<1x128xf32>
    %cst_70 = arith.constant 1.000000e+00 : f32
    %264 = vector.broadcast %cst_70 : f32 to vector<1x128xf32>
    %265 = arith.addf %264, %263 : vector<1x128xf32>
    %266 = arith.divf %264, %265 : vector<1x128xf32>
    %267 = math.tanh %261 : vector<1x128xf32>
    %268 = vector.extract_strided_slice %266 {offsets = [0, 0], sizes = [1, 32], strides = [1, 1]} : vector<1x128xf32> to vector<1x32xf32>
    %269 = vector.extract_strided_slice %266 {offsets = [0, 32], sizes = [1, 32], strides = [1, 1]} : vector<1x128xf32> to vector<1x32xf32>
    %270 = vector.extract_strided_slice %267 {offsets = [0, 64], sizes = [1, 32], strides = [1, 1]} : vector<1x128xf32> to vector<1x32xf32>
    %271 = vector.extract_strided_slice %266 {offsets = [0, 96], sizes = [1, 32], strides = [1, 1]} : vector<1x128xf32> to vector<1x32xf32>
    %272 = arith.mulf %269, %236 : vector<1x32xf32>
    %273 = arith.mulf %268, %270 : vector<1x32xf32>
    %274 = arith.addf %272, %273 : vector<1x32xf32>
    %275 = math.tanh %274 : vector<1x32xf32>
    %276 = arith.mulf %271, %275 : vector<1x32xf32>
    %c6_71 = arith.constant 6 : index
    %c0_72 = arith.constant 0 : index
    %277 = vector.load %arg11[%c6_71, %c0_72] : memref<8x32xf32, #tpu.memory_space<vmem>>, vector<1x32xf32>
    tpu.vector_store %arg11[%c6_71, %c0_72], %276 {strides = array<i32>} : memref<8x32xf32, #tpu.memory_space<vmem>>, vector<1x32xf32>,
    %c7 = arith.constant 7 : index
    %c0_73 = arith.constant 0 : index
    %278 = vector.load %arg10[%c7, %c0_73] : memref<8x128xf32, #tpu.memory_space<vmem>>, vector<1x128xf32>
    %cst_74 = arith.constant dense<0.000000e+00> : vector<1x128xf32>
    %279 = tpu.matmul %257, %7, %cst_74 {dimension_numbers = #tpu.dot_dimension_numbers<[1], [0], [0], [1], [0, 0, 1, 1], [], []>} : vector<1x32xf32>, vector<32x128xf32>, vector<1x128xf32> -> vector<1x128xf32>
    %280 = arith.addf %278, %279 : vector<1x128xf32>
    %281 = arith.negf %280 : vector<1x128xf32>
    %282 = math.exp %281 : vector<1x128xf32>
    %cst_75 = arith.constant 1.000000e+00 : f32
    %283 = vector.broadcast %cst_75 : f32 to vector<1x128xf32>
    %284 = arith.addf %283, %282 : vector<1x128xf32>
    %285 = arith.divf %283, %284 : vector<1x128xf32>
    %286 = math.tanh %280 : vector<1x128xf32>
    %287 = vector.extract_strided_slice %285 {offsets = [0, 0], sizes = [1, 32], strides = [1, 1]} : vector<1x128xf32> to vector<1x32xf32>
    %288 = vector.extract_strided_slice %285 {offsets = [0, 32], sizes = [1, 32], strides = [1, 1]} : vector<1x128xf32> to vector<1x32xf32>
    %289 = vector.extract_strided_slice %286 {offsets = [0, 64], sizes = [1, 32], strides = [1, 1]} : vector<1x128xf32> to vector<1x32xf32>
    %290 = vector.extract_strided_slice %285 {offsets = [0, 96], sizes = [1, 32], strides = [1, 1]} : vector<1x128xf32> to vector<1x32xf32>
    %291 = arith.mulf %288, %255 : vector<1x32xf32>
    %292 = arith.mulf %287, %289 : vector<1x32xf32>
    %293 = arith.addf %291, %292 : vector<1x32xf32>
    %294 = math.tanh %293 : vector<1x32xf32>
    %295 = arith.mulf %290, %294 : vector<1x32xf32>
    %cst_76 = arith.constant dense<0.000000e+00> : vector<1x128xf32>
    %296 = tpu.matmul %295, %8, %cst_76 {dimension_numbers = #tpu.dot_dimension_numbers<[1], [0], [0], [1], [0, 0, 1, 1], [], []>} : vector<1x32xf32>, vector<32x128xf32>, vector<1x128xf32> -> vector<1x128xf32>
    %cst_77 = arith.constant dense<0.000000e+00> : vector<1x128xf32>
    %297 = tpu.matmul %276, %9, %cst_77 {dimension_numbers = #tpu.dot_dimension_numbers<[1], [0], [0], [1], [0, 0, 1, 1], [], []>} : vector<1x32xf32>, vector<32x128xf32>, vector<1x128xf32> -> vector<1x128xf32>
    %298 = arith.addf %296, %297 : vector<1x128xf32>
    %299 = arith.addf %298, %10 : vector<1x128xf32>
    %300 = arith.negf %299 : vector<1x128xf32>
    %301 = math.exp %300 : vector<1x128xf32>
    %cst_78 = arith.constant 1.000000e+00 : f32
    %302 = vector.broadcast %cst_78 : f32 to vector<1x128xf32>
    %303 = arith.addf %302, %301 : vector<1x128xf32>
    %304 = arith.divf %302, %303 : vector<1x128xf32>
    %305 = math.tanh %299 : vector<1x128xf32>
    %306 = vector.extract_strided_slice %304 {offsets = [0, 0], sizes = [1, 32], strides = [1, 1]} : vector<1x128xf32> to vector<1x32xf32>
    %307 = vector.extract_strided_slice %304 {offsets = [0, 32], sizes = [1, 32], strides = [1, 1]} : vector<1x128xf32> to vector<1x32xf32>
    %308 = vector.extract_strided_slice %305 {offsets = [0, 64], sizes = [1, 32], strides = [1, 1]} : vector<1x128xf32> to vector<1x32xf32>
    %309 = vector.extract_strided_slice %304 {offsets = [0, 96], sizes = [1, 32], strides = [1, 1]} : vector<1x128xf32> to vector<1x32xf32>
    %310 = arith.mulf %307, %274 : vector<1x32xf32>
    %311 = arith.mulf %306, %308 : vector<1x32xf32>
    %312 = arith.addf %310, %311 : vector<1x32xf32>
    %313 = math.tanh %312 : vector<1x32xf32>
    %314 = arith.mulf %309, %313 : vector<1x32xf32>
    %c7_79 = arith.constant 7 : index
    %c0_80 = arith.constant 0 : index
    %315 = vector.load %arg11[%c7_79, %c0_80] : memref<8x32xf32, #tpu.memory_space<vmem>>, vector<1x32xf32>
    tpu.vector_store %arg11[%c7_79, %c0_80], %314 {strides = array<i32>} : memref<8x32xf32, #tpu.memory_space<vmem>>, vector<1x32xf32>,
    %c0_81 = arith.constant 0 : index
    %c0_82 = arith.constant 0 : index
    %316 = vector.load %arg11[%c0_81, %c0_82] : memref<8x32xf32, #tpu.memory_space<vmem>>, vector<8x32xf32>
    %c0_83 = arith.constant 0 : index
    %c0_84 = arith.constant 0 : index
    %317 = vector.load %arg7[%c0_83, %c0_84] : memref<32x8xf32, #tpu.memory_space<vmem>>, vector<32x8xf32>
    %cst_85 = arith.constant dense<0.000000e+00> : vector<8x8xf32>
    %318 = tpu.matmul %316, %317, %cst_85 {dimension_numbers = #tpu.dot_dimension_numbers<[1], [0], [0], [1], [0, 0, 1, 1], [], []>} : vector<8x32xf32>, vector<32x8xf32>, vector<8x8xf32> -> vector<8x8xf32>
    %c0_86 = arith.constant 0 : index
    %c0_87 = arith.constant 0 : index
    %319 = vector.load %arg8[%c0_86, %c0_87] : memref<1x8xf32, #tpu.memory_space<vmem>>, vector<1x8xf32>
    %320 = vector.broadcast %319 : vector<1x8xf32> to vector<8x8xf32>
    %321 = arith.addf %318, %320 : vector<8x8xf32>
    %cst_88 = arith.constant dense<0xFF800000> : vector<8xf32>
    %322 = vector.multi_reduction <maximumf>, %321, %cst_88 [1] : vector<8x8xf32> to vector<8xf32>
    %323 = vector.shape_cast %322 : vector<8xf32> to vector<8x1xf32>
    %324 = vector.broadcast %323 : vector<8x1xf32> to vector<8x8xf32>
    %325 = arith.subf %321, %324 : vector<8x8xf32>
    %326 = math.exp %325 : vector<8x8xf32>
    %cst_89 = arith.constant dense<0.000000e+00> : vector<8xf32>
    %327 = vector.multi_reduction <add>, %326, %cst_89 [1] : vector<8x8xf32> to vector<8xf32>
    %328 = vector.shape_cast %327 : vector<8xf32> to vector<8x1xf32>
    %329 = math.log %328 : vector<8x1xf32>
    %330 = arith.addf %323, %329 : vector<8x1xf32>
    %331 = vector.broadcast %330 : vector<8x1xf32> to vector<8x8xf32>
    %332 = arith.subf %321, %331 : vector<8x8xf32>
    %c0_90 = arith.constant 0 : index
    %c0_91 = arith.constant 0 : index
    %333 = vector.load %arg9[%c0_90, %c0_91] : memref<8x8xf32, #tpu.memory_space<vmem>>, vector<8x8xf32>
    tpu.vector_store %arg9[%c0_90, %c0_91], %332 {strides = array<i32>} : memref<8x8xf32, #tpu.memory_space<vmem>>, vector<8x8xf32>,
    return
  }
}

</mosaic_0001>

<llo_original>
// kernel: tpu_custom_call.1
$region0: #{tpu_custom_call.1}
  #allocation0 [shape = 'u32[]', space=smem, size = 0x4, offset = 0x4, fixed_abs, tag = 'smem constant byte address 0x4 - core index']
  #allocation1 [shape = 'u32[144,128]{1,0:T(1,128)}', space=vmem, size = 0x12000, scoped, tag = 'internal scratch']
  #allocation2 [shape = 'f32[8,128]{1,0:T(8,128)}', space=vmem, size = 0x1000, scoped, tag = 'scratch operand']
  #allocation3 [shape = 'f32[8,32]{1,0:T(8,128)}', space=vmem, size = 0x1000, scoped, tag = 'scratch operand']
  %s0 = inlined_call_operand.vmem [shape: f32[8,32], index: 0, kind: input, shape index: {}]
  %s1 = inlined_call_operand.vmem [shape: f32[32,128], index: 1, kind: input, shape index: {}]
  %s2 = inlined_call_operand.hbm [shape: f32[32,128], index: 2, kind: input, shape index: {}]
  %s3 = inlined_call_operand.vmem [shape: f32[1,128], index: 3, kind: input, shape index: {}]
  %s4 = inlined_call_operand.hbm [shape: f32[32,128], index: 4, kind: input, shape index: {}]
  %s5 = inlined_call_operand.hbm [shape: f32[32,128], index: 5, kind: input, shape index: {}]
  %s6 = inlined_call_operand.vmem [shape: f32[1,128], index: 6, kind: input, shape index: {}]
  %s7 = inlined_call_operand.vmem [shape: f32[32,8], index: 7, kind: input, shape index: {}]
  %s8 = inlined_call_operand.vmem [shape: f32[1,8], index: 8, kind: input, shape index: {}]
  %s9 = inlined_call_operand.hbm [shape: f32[8,8], index: 9, kind: output, shape index: {}]
  %s10 = sld [smem:[#allocation0]]
  $region58: #{tpu_custom_call.1} parent=0
    _
  %s12 = ssub.s32 1, %s10
  %s13 = scalar_select 0, %s12, %s10
  $region1: #{tpu_custom_call.1} parent=0
    #allocation4 [shape = 'u8[16384]{0}', space=vmem, size = 0x4000, scoped, tag = 'input window, operand 2, single buffered']
    #allocation5 [shape = 's32[1]{0}', space=sflag, size = 0x4, scoped, tag = 'scoped memory for tpu_custom_call.1']
    #allocation6 [shape = 's32[1]{0}', space=sflag, size = 0x4, scoped, tag = 'scoped memory for tpu_custom_call.1']
    #allocation7 [shape = 'u8[16384]{0}', space=vmem, size = 0x4000, scoped, tag = 'input window, operand 4, single buffered']
    #allocation8 [shape = 's32[1]{0}', space=sflag, size = 0x4, scoped, tag = 'scoped memory for tpu_custom_call.1']
    #allocation9 [shape = 'u8[16384]{0}', space=vmem, size = 0x4000, scoped, tag = 'input window, operand 5, single buffered']
    #allocation10 [shape = 'u8[4096]{0}', space=vmem, size = 0x1000, scoped, tag = 'output window, operand 0, single buffered']
    %14 = vsyncpa [#allocation5], 0
    %15 = vsyncpa [#allocation8], 0
    %16 = vsyncpa [#allocation6], 0
    // Predicated region
    $region2: #{tpu_custom_call.1} parent=1 // pred_check
      _
    $region3: #{tpu_custom_call.1} parent=1 // pred_check_branch
      %18 = sbr.rel (0) target = $region5
    $region4: #{tpu_custom_call.1} parent=1 // pred_region
      _
    $region5: #{tpu_custom_call.1} parent=1 // pred_fallthru
      _
    // Predicated region
    $region6: #{tpu_custom_call.1} parent=1 // pred_check
      _
    $region7: #{tpu_custom_call.1} parent=1 // pred_check_branch
      %20 = sbr.rel (0) target = $region9
    $region8: #{tpu_custom_call.1} parent=1 // pred_region
      _
    $region9: #{tpu_custom_call.1} parent=1 // pred_fallthru
      _
    // Predicated region
    $region10: #{tpu_custom_call.1} parent=1 // pred_check
      _
    $region11: #{tpu_custom_call.1} parent=1 // pred_check_branch
      %22 = sbr.rel (0) target = $region13
    $region12: #{tpu_custom_call.1} parent=1 // pred_region
      %s24 = ssub.s32 512, 512
      %25 = vsyncadd [#allocation5], %s24
      %s26 = sshll.u32 [#allocation4], 4
      %s27 = int_to_ptr.vmem [resolvable:$true] %s26
      %32 = dma.hbm_to_vmem [thread:$0]  %s2, 512, %s27, [#allocation5], 128, 128, 8
    $region13: #{tpu_custom_call.1} parent=1 // pred_fallthru
      _
    // Predicated region
    $region14: #{tpu_custom_call.1} parent=1 // pred_check
      _
    $region15: #{tpu_custom_call.1} parent=1 // pred_check_branch
      %34 = sbr.rel (0) target = $region17
    $region16: #{tpu_custom_call.1} parent=1 // pred_region
      _
    $region17: #{tpu_custom_call.1} parent=1 // pred_fallthru
      _
    // Predicated region
    $region18: #{tpu_custom_call.1} parent=1 // pred_check
      _
    $region19: #{tpu_custom_call.1} parent=1 // pred_check_branch
      %36 = sbr.rel (0) target = $region21
    $region20: #{tpu_custom_call.1} parent=1 // pred_region
      %s38 = ssub.s32 512, 512
      %39 = vsyncadd [#allocation8], %s38
      %s40 = sshll.u32 [#allocation7], 4
      %s41 = int_to_ptr.vmem [resolvable:$true] %s40
      %46 = dma.hbm_to_vmem [thread:$0]  %s4, 512, %s41, [#allocation8], 128, 128, 8
    $region21: #{tpu_custom_call.1} parent=1 // pred_fallthru
      _
    // Predicated region
    $region22: #{tpu_custom_call.1} parent=1 // pred_check
      _
    $region23: #{tpu_custom_call.1} parent=1 // pred_check_branch
      %48 = sbr.rel (0) target = $region25
    $region24: #{tpu_custom_call.1} parent=1 // pred_region
      %s50 = ssub.s32 512, 512
      %51 = vsyncadd [#allocation8], %s50
      %s52 = sshll.u32 [#allocation9], 4
      %s53 = int_to_ptr.vmem [resolvable:$true] %s52
      %58 = dma.hbm_to_vmem [thread:$0]  %s5, 512, %s53, [#allocation8], 128, 128, 8
    $region25: #{tpu_custom_call.1} parent=1 // pred_fallthru
      _
    // Predicated region
    $region26: #{tpu_custom_call.1} parent=1 // pred_check
      _
    $region27: #{tpu_custom_call.1} parent=1 // pred_check_branch
      %60 = sbr.rel (0) target = $region29
    $region28: #{tpu_custom_call.1} parent=1 // pred_region
      _
    $region29: #{tpu_custom_call.1} parent=1 // pred_fallthru
      _
    // Predicated region
    $region30: #{tpu_custom_call.1} parent=1 // pred_check
      _
    $region31: #{tpu_custom_call.1} parent=1 // pred_check_branch
      %62 = sbr.rel (0) target = $region33
    $region32: #{tpu_custom_call.1} parent=1 // pred_region
      _
    $region33: #{tpu_custom_call.1} parent=1 // pred_fallthru
      _
    // Predicated region
    $region34: #{tpu_custom_call.1} parent=1 // pred_check
      _
    $region35: #{tpu_custom_call.1} parent=1 // pred_check_branch
      %64 = sbr.rel (0) target = $region37
    $region36: #{tpu_custom_call.1} parent=1 // pred_region
      _
    $region37: #{tpu_custom_call.1} parent=1 // pred_fallthru
      _
    // Predicated region
    $region38: #{tpu_custom_call.1} parent=1 // pred_check
      _
    $region39: #{tpu_custom_call.1} parent=1 // pred_check_branch
      %66 = sbr.rel (0) target = $region41
    $region40: #{tpu_custom_call.1} parent=1 // pred_region
      %67 = dma.done [#allocation5], 512
    $region41: #{tpu_custom_call.1} parent=1 // pred_fallthru
      _
    // Predicated region
    $region42: #{tpu_custom_call.1} parent=1 // pred_check
      _
    $region43: #{tpu_custom_call.1} parent=1 // pred_check_branch
      %69 = sbr.rel (0) target = $region45
    $region44: #{tpu_custom_call.1} parent=1 // pred_region
      %70 = dma.done [#allocation8], 512
    $region45: #{tpu_custom_call.1} parent=1 // pred_fallthru
      _
    // Predicated region
    $region46: #{tpu_custom_call.1} parent=1 // pred_check
      _
    $region47: #{tpu_custom_call.1} parent=1 // pred_check_branch
      %72 = sbr.rel (0) target = $region49
    $region48: #{tpu_custom_call.1} parent=1 // pred_region
      %73 = dma.done [#allocation8], 512
    $region49: #{tpu_custom_call.1} parent=1 // pred_fallthru
      _
    %v74 = vld [vmem:[%s0] sm:$0xff]
    %v75 = vld [vmem:[%s1] sm:$0xff]
    %v76 = vld [vmem:[%s1 + $0x8] sm:$0xff]
    %v77 = vld [vmem:[%s1 + $0x10] sm:$0xff]
    %v78 = vld [vmem:[%s1 + $0x18] sm:$0xff]
    %v79 = vld [vmem:[%s3] sm:$0x1]
    %v81 = vlaneseq
    %v82 = vshrl.u32 %v81, 7
    %v83 = vsub.s32 0, %v82
    %v84 = vrot.slane %v79, %v83
    %vm86 = vcmask 261120
    %v88 = vsel %vm86, %v74, 0
    %90 = vmatprep.subr.mxu0 0.0
    %91 = vmatpush1.msra.mxu0 0.0
    %92 = vmatprep.subr.mxu0 0.0
    %93 = vmatpush1.msra.mxu0 0.0
    %94 = vmatprep.subr.mxu0 0.0
    %95 = vmatpush1.msra.mxu0 0.0
    %96 = vmatprep.subr.mxu0 0.0
    %97 = vmatpush1.msra.mxu0 0.0
    %98 = vmatprep.subr.mxu0 0.0
    %99 = vmatpush1.msra.mxu0 0.0
    %100 = vmatprep.subr.mxu0 0.0
    %101 = vmatpush1.msra.mxu0 0.0
    %102 = vmatprep.subr.mxu0 0.0
    %103 = vmatpush1.msra.mxu0 0.0
    %104 = vmatprep.subr.mxu0 0.0
    %105 = vmatpush1.msra.mxu0 0.0
    %106 = vmatprep.subr.mxu0 0.0
    %107 = vmatpush1.msra.mxu0 0.0
    %108 = vmatprep.subr.mxu0 0.0
    %109 = vmatpush1.msra.mxu0 0.0
    %110 = vmatprep.subr.mxu0 0.0
    %111 = vmatpush1.msra.mxu0 0.0
    %112 = vmatprep.subr.mxu0 0.0
    %113 = vmatpush1.msra.mxu0 0.0
    %114 = vmatprep.subr.mxu0 0.0
    %115 = vmatpush1.msra.mxu0 %v78
    %116 = vmatprep.subr.mxu0 0.0
    %117 = vmatpush1.msra.mxu0 %v77
    %118 = vmatprep.subr.mxu0 0.0
    %119 = vmatpush1.msra.mxu0 %v76
    %120 = vmatprep.subr.mxu0 0.0
    %121 = vmatpush1.msra.mxu0 %v75
    %122 = vmatprep.subr.mxu0 0.0
    %123 = vmatpush2.msra.mxu0 0.0
    %124 = vmatprep.subr.mxu0 0.0
    %125 = vmatpush2.msra.mxu0 0.0
    %126 = vmatprep.subr.mxu0 0.0
    %127 = vmatpush2.msra.mxu0 0.0
    %128 = vmatprep.subr.mxu0 0.0
    %129 = vmatpush2.msra.mxu0 0.0
    %130 = vmatprep.subr.mxu0 0.0
    %131 = vmatpush2.msra.mxu0 0.0
    %132 = vmatprep.subr.mxu0 0.0
    %133 = vmatpush2.msra.mxu0 0.0
    %134 = vmatprep.subr.mxu0 0.0
    %135 = vmatpush2.msra.mxu0 0.0
    %136 = vmatprep.subr.mxu0 0.0
    %137 = vmatpush2.msra.mxu0 0.0
    %138 = vmatprep.subr.mxu0 0.0
    %139 = vmatpush2.msra.mxu0 0.0
    %140 = vmatprep.subr.mxu0 0.0
    %141 = vmatpush2.msra.mxu0 0.0
    %142 = vmatprep.subr.mxu0 0.0
    %143 = vmatpush2.msra.mxu0 0.0
    %144 = vmatprep.subr.mxu0 0.0
    %145 = vmatpush2.msra.mxu0 0.0
    %146 = vmatprep.subr.mxu0 0.0
    %147 = vmatpush2.msra.mxu0 0.0
    %148 = vmatprep.subr.mxu0 0.0
    %149 = vmatpush2.msra.mxu0 0.0
    %150 = vmatprep.subr.mxu0 0.0
    %151 = vmatpush2.msra.mxu0 0.0
    %152 = vmatprep.subr.mxu0 0.0
    %153 = vmatpush2.msra.mxu0 0.0
    %154 = vmatprep.mubr.f32.mxu0 0.0
    %155 = vmatmul.mubr.f32.gmra.mxu0 %v88
    %v156 = vpop.f32.mrf.mxu0
    %v157 = vadd.f32 %v84, %v156
    %v158 = vpop.f32.mrf.mxu0
    %159 = vdwg.mxu0
    %160 = vst [vmem:[#allocation2] sm:$0xff] %v157
    %v161 = vld [vmem:[#allocation4] sm:$0xff]
    %v162 = vld [vmem:[#allocation4 + $0x8] sm:$0xff]
    %v163 = vld [vmem:[#allocation4 + $0x10] sm:$0xff]
    %v164 = vld [vmem:[#allocation4 + $0x18] sm:$0xff]
    %v165 = vld [vmem:[#allocation7] sm:$0xff]
    %v166 = vld [vmem:[#allocation7 + $0x8] sm:$0xff]
    %v167 = vld [vmem:[#allocation7 + $0x10] sm:$0xff]
    %v168 = vld [vmem:[#allocation7 + $0x18] sm:$0xff]
    %v169 = vld [vmem:[#allocation9] sm:$0xff]
    %v170 = vld [vmem:[#allocation9 + $0x8] sm:$0xff]
    %v171 = vld [vmem:[#allocation9 + $0x10] sm:$0xff]
    %v172 = vld [vmem:[#allocation9 + $0x18] sm:$0xff]
    %v173 = vld [vmem:[%s6] sm:$0x1]
    %v174 = vld [vmem:[#allocation2] sm:$0x1]
    %v176 = vsel %vm86, 0.0, 0
    %178 = vmatprep.subr.mxu0 0.0
    %179 = vmatpush1.msra.mxu0 0.0
    %180 = vmatprep.subr.mxu0 0.0
    %181 = vmatpush1.msra.mxu0 0.0
    %182 = vmatprep.subr.mxu0 0.0
    %183 = vmatpush1.msra.mxu0 0.0
    %184 = vmatprep.subr.mxu0 0.0
    %185 = vmatpush1.msra.mxu0 0.0
    %186 = vmatprep.subr.mxu0 0.0
    %187 = vmatpush1.msra.mxu0 0.0
    %188 = vmatprep.subr.mxu0 0.0
    %189 = vmatpush1.msra.mxu0 0.0
    %190 = vmatprep.subr.mxu0 0.0
    %191 = vmatpush1.msra.mxu0 0.0
    %192 = vmatprep.subr.mxu0 0.0
    %193 = vmatpush1.msra.mxu0 0.0
    %194 = vmatprep.subr.mxu0 0.0
    %195 = vmatpush1.msra.mxu0 0.0
    %196 = vmatprep.subr.mxu0 0.0
    %197 = vmatpush1.msra.mxu0 0.0
    %198 = vmatprep.subr.mxu0 0.0
    %199 = vmatpush1.msra.mxu0 0.0
    %200 = vmatprep.subr.mxu0 0.0
    %201 = vmatpush1.msra.mxu0 0.0
    %202 = vmatprep.subr.mxu0 0.0
    %203 = vmatpush1.msra.mxu0 %v164
    %204 = vmatprep.subr.mxu0 0.0
    %205 = vmatpush1.msra.mxu0 %v163
    %206 = vmatprep.subr.mxu0 0.0
    %207 = vmatpush1.msra.mxu0 %v162
    %208 = vmatprep.subr.mxu0 0.0
    %209 = vmatpush1.msra.mxu0 %v161
    %210 = vmatprep.subr.mxu0 0.0
    %211 = vmatpush2.msra.mxu0 0.0
    %212 = vmatprep.subr.mxu0 0.0
    %213 = vmatpush2.msra.mxu0 0.0
    %214 = vmatprep.subr.mxu0 0.0
    %215 = vmatpush2.msra.mxu0 0.0
    %216 = vmatprep.subr.mxu0 0.0
    %217 = vmatpush2.msra.mxu0 0.0
    %218 = vmatprep.subr.mxu0 0.0
    %219 = vmatpush2.msra.mxu0 0.0
    %220 = vmatprep.subr.mxu0 0.0
    %221 = vmatpush2.msra.mxu0 0.0
    %222 = vmatprep.subr.mxu0 0.0
    %223 = vmatpush2.msra.mxu0 0.0
    %224 = vmatprep.subr.mxu0 0.0
    %225 = vmatpush2.msra.mxu0 0.0
    %226 = vmatprep.subr.mxu0 0.0
    %227 = vmatpush2.msra.mxu0 0.0
    %228 = vmatprep.subr.mxu0 0.0
    %229 = vmatpush2.msra.mxu0 0.0
    %230 = vmatprep.subr.mxu0 0.0
    %231 = vmatpush2.msra.mxu0 0.0
    %232 = vmatprep.subr.mxu0 0.0
    %233 = vmatpush2.msra.mxu0 0.0
    %234 = vmatprep.subr.mxu0 0.0
    %235 = vmatpush2.msra.mxu0 0.0
    %236 = vmatprep.subr.mxu0 0.0
    %237 = vmatpush2.msra.mxu0 0.0
    %238 = vmatprep.subr.mxu0 0.0
    %239 = vmatpush2.msra.mxu0 0.0
    %240 = vmatprep.subr.mxu0 0.0
    %241 = vmatpush2.msra.mxu0 0.0
    %242 = vmatprep.mubr.f32.mxu0 0.0
    %243 = vmatmul.mubr.f32.gmra.mxu0 %v176
    %v244 = vpop.f32.mrf.mxu0
    %v245 = vadd.f32 0.0, %v244
    %v246 = vpop.f32.mrf.mxu0
    %247 = vdwg.mxu0
    %v248 = vadd.f32 %v174, %v245
    %v249 = vxor.u32 %v248, 2147483648
    %v250 = vmul.f32 %v249, 1.442695
    %v251 = vpow.pop %v250
    %v252 = vadd.f32 %v251, 1.0
    %v253 = vrcp.pop %v252
    %v254 = vmul.f32 1.0, %v253
    %v255 = vtanh.pop %v248
    %v256 = vmul.f32 %v254, 0.0
    %258 = vrot.lane.b32.xlu0 %v255, 64
    %v259 = vpop.permute.xlu0 %258
    %v261 = vmul.f32 %v254, %v259
    %263 = vrot.lane.b32.xlu0 %v261, 32
    %v264 = vpop.permute.xlu0 %263
    %v266 = vadd.f32 %v256, %v264
    %v267 = vtanh.pop %v266
    %269 = vrot.lane.b32.xlu0 %v267, 64
    %v270 = vpop.permute.xlu0 %269
    %v272 = vmul.f32 %v254, %v270
    %273 = vmatprep.subr.mxu0 0.0
    %274 = vmatpush1.msra.mxu0 0.0
    %275 = vmatprep.subr.mxu0 0.0
    %276 = vmatpush1.msra.mxu0 0.0
    %277 = vmatprep.subr.mxu0 0.0
    %278 = vmatpush1.msra.mxu0 0.0
    %279 = vmatprep.subr.mxu0 0.0
    %280 = vmatpush1.msra.mxu0 0.0
    %281 = vmatprep.subr.mxu0 0.0
    %282 = vmatpush1.msra.mxu0 0.0
    %283 = vmatprep.subr.mxu0 0.0
    %284 = vmatpush1.msra.mxu0 0.0
    %285 = vmatprep.subr.mxu0 0.0
    %286 = vmatpush1.msra.mxu0 0.0
    %287 = vmatprep.subr.mxu0 0.0
    %288 = vmatpush1.msra.mxu0 0.0
    %289 = vmatprep.subr.mxu0 0.0
    %290 = vmatpush1.msra.mxu0 0.0
    %291 = vmatprep.subr.mxu0 0.0
    %292 = vmatpush1.msra.mxu0 0.0
    %293 = vmatprep.subr.mxu0 0.0
    %294 = vmatpush1.msra.mxu0 0.0
    %295 = vmatprep.subr.mxu0 0.0
    %296 = vmatpush1.msra.mxu0 0.0
    %297 = vmatprep.subr.mxu0 0.0
    %298 = vmatpush1.msra.mxu0 %v172
    %299 = vmatprep.subr.mxu0 0.0
    %300 = vmatpush1.msra.mxu0 %v171
    %301 = vmatprep.subr.mxu0 0.0
    %302 = vmatpush1.msra.mxu0 %v170
    %303 = vmatprep.subr.mxu0 0.0
    %304 = vmatpush1.msra.mxu0 %v169
    %305 = vmatprep.subr.mxu0 0.0
    %306 = vmatpush2.msra.mxu0 0.0
    %307 = vmatprep.subr.mxu0 0.0
    %308 = vmatpush2.msra.mxu0 0.0
    %309 = vmatprep.subr.mxu0 0.0
    %310 = vmatpush2.msra.mxu0 0.0
    %311 = vmatprep.subr.mxu0 0.0
    %312 = vmatpush2.msra.mxu0 0.0
    %313 = vmatprep.subr.mxu0 0.0
    %314 = vmatpush2.msra.mxu0 0.0
    %315 = vmatprep.subr.mxu0 0.0
    %316 = vmatpush2.msra.mxu0 0.0
    %317 = vmatprep.subr.mxu0 0.0
    %318 = vmatpush2.msra.mxu0 0.0
    %319 = vmatprep.subr.mxu0 0.0
    %320 = vmatpush2.msra.mxu0 0.0
    %321 = vmatprep.subr.mxu0 0.0
    %322 = vmatpush2.msra.mxu0 0.0
    %323 = vmatprep.subr.mxu0 0.0
    %324 = vmatpush2.msra.mxu0 0.0
    %325 = vmatprep.subr.mxu0 0.0
    %326 = vmatpush2.msra.mxu0 0.0
    %327 = vmatprep.subr.mxu0 0.0
    %328 = vmatpush2.msra.mxu0 0.0
    %329 = vmatprep.subr.mxu0 0.0
    %330 = vmatpush2.msra.mxu0 0.0
    %331 = vmatprep.subr.mxu0 0.0
    %332 = vmatpush2.msra.mxu0 0.0
    %333 = vmatprep.subr.mxu0 0.0
    %334 = vmatpush2.msra.mxu0 0.0
    %335 = vmatprep.subr.mxu0 0.0
    %336 = vmatpush2.msra.mxu0 0.0
    %337 = vmatprep.mubr.f32.mxu0 0.0
    %338 = vmatmul.mubr.f32.gmra.mxu0 %v176
    %v339 = vpop.f32.mrf.mxu0
    %v340 = vadd.f32 0.0, %v339
    %v341 = vpop.f32.mrf.mxu0
    %342 = vdwg.mxu0
    %344 = vrot.lane.b32.xlu0 %v272, 32
    %v345 = vpop.permute.xlu0 %344
    %v346 = vsel %vm86, %v345, 0
    %348 = vmatprep.subr.mxu0 0.0
    %349 = vmatpush1.msra.mxu0 0.0
    %350 = vmatprep.subr.mxu0 0.0
    %351 = vmatpush1.msra.mxu0 0.0
    %352 = vmatprep.subr.mxu0 0.0
    %353 = vmatpush1.msra.mxu0 0.0
    %354 = vmatprep.subr.mxu0 0.0
    %355 = vmatpush1.msra.mxu0 0.0
    %356 = vmatprep.subr.mxu0 0.0
    %357 = vmatpush1.msra.mxu0 0.0
    %358 = vmatprep.subr.mxu0 0.0
    %359 = vmatpush1.msra.mxu0 0.0
    %360 = vmatprep.subr.mxu0 0.0
    %361 = vmatpush1.msra.mxu0 0.0
    %362 = vmatprep.subr.mxu0 0.0
    %363 = vmatpush1.msra.mxu0 0.0
    %364 = vmatprep.subr.mxu0 0.0
    %365 = vmatpush1.msra.mxu0 0.0
    %366 = vmatprep.subr.mxu0 0.0
    %367 = vmatpush1.msra.mxu0 0.0
    %368 = vmatprep.subr.mxu0 0.0
    %369 = vmatpush1.msra.mxu0 0.0
    %370 = vmatprep.subr.mxu0 0.0
    %371 = vmatpush1.msra.mxu0 0.0
    %372 = vmatprep.subr.mxu0 0.0
    %373 = vmatpush1.msra.mxu0 %v168
    %374 = vmatprep.subr.mxu0 0.0
    %375 = vmatpush1.msra.mxu0 %v167
    %376 = vmatprep.subr.mxu0 0.0
    %377 = vmatpush1.msra.mxu0 %v166
    %378 = vmatprep.subr.mxu0 0.0
    %379 = vmatpush1.msra.mxu0 %v165
    %380 = vmatprep.subr.mxu0 0.0
    %381 = vmatpush2.msra.mxu0 0.0
    %382 = vmatprep.subr.mxu0 0.0
    %383 = vmatpush2.msra.mxu0 0.0
    %384 = vmatprep.subr.mxu0 0.0
    %385 = vmatpush2.msra.mxu0 0.0
    %386 = vmatprep.subr.mxu0 0.0
    %387 = vmatpush2.msra.mxu0 0.0
    %388 = vmatprep.subr.mxu0 0.0
    %389 = vmatpush2.msra.mxu0 0.0
    %390 = vmatprep.subr.mxu0 0.0
    %391 = vmatpush2.msra.mxu0 0.0
    %392 = vmatprep.subr.mxu0 0.0
    %393 = vmatpush2.msra.mxu0 0.0
    %394 = vmatprep.subr.mxu0 0.0
    %395 = vmatpush2.msra.mxu0 0.0
    %396 = vmatprep.subr.mxu0 0.0
    %397 = vmatpush2.msra.mxu0 0.0
    %398 = vmatprep.subr.mxu0 0.0
    %399 = vmatpush2.msra.mxu0 0.0
    %400 = vmatprep.subr.mxu0 0.0
    %401 = vmatpush2.msra.mxu0 0.0
    %402 = vmatprep.subr.mxu0 0.0
    %403 = vmatpush2.msra.mxu0 0.0
    %404 = vmatprep.subr.mxu0 0.0
    %405 = vmatpush2.msra.mxu0 0.0
    %406 = vmatprep.subr.mxu0 0.0
    %407 = vmatpush2.msra.mxu0 0.0
    %408 = vmatprep.subr.mxu0 0.0
    %409 = vmatpush2.msra.mxu0 0.0
    %410 = vmatprep.subr.mxu0 0.0
    %411 = vmatpush2.msra.mxu0 0.0
    %412 = vmatprep.mubr.f32.mxu0 0.0
    %413 = vmatmul.mubr.f32.gmra.mxu0 %v346
    %v414 = vpop.f32.mrf.mxu0
    %v415 = vadd.f32 %v340, %v414
    %v416 = vpop.f32.mrf.mxu0
    %417 = vdwg.mxu0
    %v418 = vadd.f32 %v415, %v173
    %v419 = vxor.u32 %v418, 2147483648
    %v420 = vmul.f32 %v419, 1.442695
    %v421 = vpow.pop %v420
    %v422 = vadd.f32 %v421, 1.0
    %v423 = vrcp.pop %v422
    %v424 = vmul.f32 1.0, %v423
    %v425 = vtanh.pop %v418
    %v426 = vmul.f32 %v424, 0.0
    %428 = vrot.lane.b32.xlu0 %v425, 64
    %v429 = vpop.permute.xlu0 %428
    %v431 = vmul.f32 %v424, %v429
    %433 = vrot.lane.b32.xlu0 %v431, 32
    %v434 = vpop.permute.xlu0 %433
    %v436 = vadd.f32 %v426, %v434
    %v437 = vtanh.pop %v436
    %439 = vrot.lane.b32.xlu0 %v437, 64
    %v440 = vpop.permute.xlu0 %439
    %v442 = vmul.f32 %v424, %v440
    %444 = vrot.lane.b32.xlu0 %v442, 32
    %v445 = vpop.permute.xlu0 %444
    %vm447 = vcmask 253952
    %448 = vst.msk [vmem:[#allocation3] sm:$0x1] %vm447, %v445
    %v449 = vld [vmem:[#allocation2 + $0x1] sm:$0x1]
    %450 = vmatprep.subr.mxu0 0.0
    %451 = vmatpush1.msra.mxu0 0.0
    %452 = vmatprep.subr.mxu0 0.0
    %453 = vmatpush1.msra.mxu0 0.0
    %454 = vmatprep.subr.mxu0 0.0
    %455 = vmatpush1.msra.mxu0 0.0
    %456 = vmatprep.subr.mxu0 0.0
    %457 = vmatpush1.msra.mxu0 0.0
    %458 = vmatprep.subr.mxu0 0.0
    %459 = vmatpush1.msra.mxu0 0.0
    %460 = vmatprep.subr.mxu0 0.0
    %461 = vmatpush1.msra.mxu0 0.0
    %462 = vmatprep.subr.mxu0 0.0
    %463 = vmatpush1.msra.mxu0 0.0
    %464 = vmatprep.subr.mxu0 0.0
    %465 = vmatpush1.msra.mxu0 0.0
    %466 = vmatprep.subr.mxu0 0.0
    %467 = vmatpush1.msra.mxu0 0.0
    %468 = vmatprep.subr.mxu0 0.0
    %469 = vmatpush1.msra.mxu0 0.0
    %470 = vmatprep.subr.mxu0 0.0
    %471 = vmatpush1.msra.mxu0 0.0
    %472 = vmatprep.subr.mxu0 0.0
    %473 = vmatpush1.msra.mxu0 0.0
    %474 = vmatprep.subr.mxu0 0.0
    %475 = vmatpush1.msra.mxu0 %v164
    %476 = vmatprep.subr.mxu0 0.0
    %477 = vmatpush1.msra.mxu0 %v163
    %478 = vmatprep.subr.mxu0 0.0
    %479 = vmatpush1.msra.mxu0 %v162
    %480 = vmatprep.subr.mxu0 0.0
    %481 = vmatpush1.msra.mxu0 %v161
    %482 = vmatprep.subr.mxu0 0.0
    %483 = vmatpush2.msra.mxu0 0.0
    %484 = vmatprep.subr.mxu0 0.0
    %485 = vmatpush2.msra.mxu0 0.0
    %486 = vmatprep.subr.mxu0 0.0
    %487 = vmatpush2.msra.mxu0 0.0
    %488 = vmatprep.subr.mxu0 0.0
    %489 = vmatpush2.msra.mxu0 0.0
    %490 = vmatprep.subr.mxu0 0.0
    %491 = vmatpush2.msra.mxu0 0.0
    %492 = vmatprep.subr.mxu0 0.0
    %493 = vmatpush2.msra.mxu0 0.0
    %494 = vmatprep.subr.mxu0 0.0
    %495 = vmatpush2.msra.mxu0 0.0
    %496 = vmatprep.subr.mxu0 0.0
    %497 = vmatpush2.msra.mxu0 0.0
    %498 = vmatprep.subr.mxu0 0.0
    %499 = vmatpush2.msra.mxu0 0.0
    %500 = vmatprep.subr.mxu0 0.0
    %501 = vmatpush2.msra.mxu0 0.0
    %502 = vmatprep.subr.mxu0 0.0
    %503 = vmatpush2.msra.mxu0 0.0
    %504 = vmatprep.subr.mxu0 0.0
    %505 = vmatpush2.msra.mxu0 0.0
    %506 = vmatprep.subr.mxu0 0.0
    %507 = vmatpush2.msra.mxu0 0.0
    %508 = vmatprep.subr.mxu0 0.0
    %509 = vmatpush2.msra.mxu0 0.0
    %510 = vmatprep.subr.mxu0 0.0
    %511 = vmatpush2.msra.mxu0 0.0
    %512 = vmatprep.subr.mxu0 0.0
    %513 = vmatpush2.msra.mxu0 0.0
    %514 = vmatprep.mubr.f32.mxu0 0.0
    %515 = vmatmul.mubr.f32.gmra.mxu0 %v346
    %v516 = vpop.f32.mrf.mxu0
    %v517 = vadd.f32 0.0, %v516
    %v518 = vpop.f32.mrf.mxu0
    %519 = vdwg.mxu0
    %v520 = vadd.f32 %v449, %v517
    %v521 = vxor.u32 %v520, 2147483648
    %v522 = vmul.f32 %v521, 1.442695
    %v523 = vpow.pop %v522
    %v524 = vadd.f32 %v523, 1.0
    %v525 = vrcp.pop %v524
    %v526 = vmul.f32 1.0, %v525
    %v527 = vtanh.pop %v520
    %v528 = vmul.f32 %v526, %v266
    %530 = vrot.lane.b32.xlu0 %v527, 64
    %v531 = vpop.permute.xlu0 %530
    %v533 = vmul.f32 %v526, %v531
    %535 = vrot.lane.b32.xlu0 %v533, 32
    %v536 = vpop.permute.xlu0 %535
    %v538 = vadd.f32 %v528, %v536
    %v539 = vtanh.pop %v538
    %541 = vrot.lane.b32.xlu0 %v539, 64
    %v542 = vpop.permute.xlu0 %541
    %v544 = vmul.f32 %v526, %v542
    %v545 = vsel %vm86, %v445, 0
    %547 = vmatprep.subr.mxu0 0.0
    %548 = vmatpush1.msra.mxu0 0.0
    %549 = vmatprep.subr.mxu0 0.0
    %550 = vmatpush1.msra.mxu0 0.0
    %551 = vmatprep.subr.mxu0 0.0
    %552 = vmatpush1.msra.mxu0 0.0
    %553 = vmatprep.subr.mxu0 0.0
    %554 = vmatpush1.msra.mxu0 0.0
    %555 = vmatprep.subr.mxu0 0.0
    %556 = vmatpush1.msra.mxu0 0.0
    %557 = vmatprep.subr.mxu0 0.0
    %558 = vmatpush1.msra.mxu0 0.0
    %559 = vmatprep.subr.mxu0 0.0
    %560 = vmatpush1.msra.mxu0 0.0
    %561 = vmatprep.subr.mxu0 0.0
    %562 = vmatpush1.msra.mxu0 0.0
    %563 = vmatprep.subr.mxu0 0.0
    %564 = vmatpush1.msra.mxu0 0.0
    %565 = vmatprep.subr.mxu0 0.0
    %566 = vmatpush1.msra.mxu0 0.0
    %567 = vmatprep.subr.mxu0 0.0
    %568 = vmatpush1.msra.mxu0 0.0
    %569 = vmatprep.subr.mxu0 0.0
    %570 = vmatpush1.msra.mxu0 0.0
    %571 = vmatprep.subr.mxu0 0.0
    %572 = vmatpush1.msra.mxu0 %v172
    %573 = vmatprep.subr.mxu0 0.0
    %574 = vmatpush1.msra.mxu0 %v171
    %575 = vmatprep.subr.mxu0 0.0
    %576 = vmatpush1.msra.mxu0 %v170
    %577 = vmatprep.subr.mxu0 0.0
    %578 = vmatpush1.msra.mxu0 %v169
    %579 = vmatprep.subr.mxu0 0.0
    %580 = vmatpush2.msra.mxu0 0.0
    %581 = vmatprep.subr.mxu0 0.0
    %582 = vmatpush2.msra.mxu0 0.0
    %583 = vmatprep.subr.mxu0 0.0
    %584 = vmatpush2.msra.mxu0 0.0
    %585 = vmatprep.subr.mxu0 0.0
    %586 = vmatpush2.msra.mxu0 0.0
    %587 = vmatprep.subr.mxu0 0.0
    %588 = vmatpush2.msra.mxu0 0.0
    %589 = vmatprep.subr.mxu0 0.0
    %590 = vmatpush2.msra.mxu0 0.0
    %591 = vmatprep.subr.mxu0 0.0
    %592 = vmatpush2.msra.mxu0 0.0
    %593 = vmatprep.subr.mxu0 0.0
    %594 = vmatpush2.msra.mxu0 0.0
    %595 = vmatprep.subr.mxu0 0.0
    %596 = vmatpush2.msra.mxu0 0.0
    %597 = vmatprep.subr.mxu0 0.0
    %598 = vmatpush2.msra.mxu0 0.0
    %599 = vmatprep.subr.mxu0 0.0
    %600 = vmatpush2.msra.mxu0 0.0
    %601 = vmatprep.subr.mxu0 0.0
    %602 = vmatpush2.msra.mxu0 0.0
    %603 = vmatprep.subr.mxu0 0.0
    %604 = vmatpush2.msra.mxu0 0.0
    %605 = vmatprep.subr.mxu0 0.0
    %606 = vmatpush2.msra.mxu0 0.0
    %607 = vmatprep.subr.mxu0 0.0
    %608 = vmatpush2.msra.mxu0 0.0
    %609 = vmatprep.subr.mxu0 0.0
    %610 = vmatpush2.msra.mxu0 0.0
    %611 = vmatprep.mubr.f32.mxu0 0.0
    %612 = vmatmul.mubr.f32.gmra.mxu0 %v545
    %v613 = vpop.f32.mrf.mxu0
    %v614 = vadd.f32 0.0, %v613
    %v615 = vpop.f32.mrf.mxu0
    %616 = vdwg.mxu0
    %618 = vrot.lane.b32.xlu0 %v544, 32
    %v619 = vpop.permute.xlu0 %618
    %v620 = vsel %vm86, %v619, 0
    %622 = vmatprep.subr.mxu0 0.0
    %623 = vmatpush1.msra.mxu0 0.0
    %624 = vmatprep.subr.mxu0 0.0
    %625 = vmatpush1.msra.mxu0 0.0
    %626 = vmatprep.subr.mxu0 0.0
    %627 = vmatpush1.msra.mxu0 0.0
    %628 = vmatprep.subr.mxu0 0.0
    %629 = vmatpush1.msra.mxu0 0.0
    %630 = vmatprep.subr.mxu0 0.0
    %631 = vmatpush1.msra.mxu0 0.0
    %632 = vmatprep.subr.mxu0 0.0
    %633 = vmatpush1.msra.mxu0 0.0
    %634 = vmatprep.subr.mxu0 0.0
    %635 = vmatpush1.msra.mxu0 0.0
    %636 = vmatprep.subr.mxu0 0.0
    %637 = vmatpush1.msra.mxu0 0.0
    %638 = vmatprep.subr.mxu0 0.0
    %639 = vmatpush1.msra.mxu0 0.0
    %640 = vmatprep.subr.mxu0 0.0
    %641 = vmatpush1.msra.mxu0 0.0
    %642 = vmatprep.subr.mxu0 0.0
    %643 = vmatpush1.msra.mxu0 0.0
    %644 = vmatprep.subr.mxu0 0.0
    %645 = vmatpush1.msra.mxu0 0.0
    %646 = vmatprep.subr.mxu0 0.0
    %647 = vmatpush1.msra.mxu0 %v168
    %648 = vmatprep.subr.mxu0 0.0
    %649 = vmatpush1.msra.mxu0 %v167
    %650 = vmatprep.subr.mxu0 0.0
    %651 = vmatpush1.msra.mxu0 %v166
    %652 = vmatprep.subr.mxu0 0.0
    %653 = vmatpush1.msra.mxu0 %v165
    %654 = vmatprep.subr.mxu0 0.0
    %655 = vmatpush2.msra.mxu0 0.0
    %656 = vmatprep.subr.mxu0 0.0
    %657 = vmatpush2.msra.mxu0 0.0
    %658 = vmatprep.subr.mxu0 0.0
    %659 = vmatpush2.msra.mxu0 0.0
    %660 = vmatprep.subr.mxu0 0.0
    %661 = vmatpush2.msra.mxu0 0.0
    %662 = vmatprep.subr.mxu0 0.0
    %663 = vmatpush2.msra.mxu0 0.0
    %664 = vmatprep.subr.mxu0 0.0
    %665 = vmatpush2.msra.mxu0 0.0
    %666 = vmatprep.subr.mxu0 0.0
    %667 = vmatpush2.msra.mxu0 0.0
    %668 = vmatprep.subr.mxu0 0.0
    %669 = vmatpush2.msra.mxu0 0.0
    %670 = vmatprep.subr.mxu0 0.0
    %671 = vmatpush2.msra.mxu0 0.0
    %672 = vmatprep.subr.mxu0 0.0
    %673 = vmatpush2.msra.mxu0 0.0
    %674 = vmatprep.subr.mxu0 0.0
    %675 = vmatpush2.msra.mxu0 0.0
    %676 = vmatprep.subr.mxu0 0.0
    %677 = vmatpush2.msra.mxu0 0.0
    %678 = vmatprep.subr.mxu0 0.0
    %679 = vmatpush2.msra.mxu0 0.0
    %680 = vmatprep.subr.mxu0 0.0
    %681 = vmatpush2.msra.mxu0 0.0
    %682 = vmatprep.subr.mxu0 0.0
    %683 = vmatpush2.msra.mxu0 0.0
    %684 = vmatprep.subr.mxu0 0.0
    %685 = vmatpush2.msra.mxu0 0.0
    %686 = vmatprep.mubr.f32.mxu0 0.0
    %687 = vmatmul.mubr.f32.gmra.mxu0 %v620
    %v688 = vpop.f32.mrf.mxu0
    %v689 = vadd.f32 %v614, %v688
    %v690 = vpop.f32.mrf.mxu0
    %691 = vdwg.mxu0
    %v692 = vadd.f32 %v689, %v173
    %v693 = vxor.u32 %v692, 2147483648
    %v694 = vmul.f32 %v693, 1.442695
    %v695 = vpow.pop %v694
    %v696 = vadd.f32 %v695, 1.0
    %v697 = vrcp.pop %v696
    %v698 = vmul.f32 1.0, %v697
    %v699 = vtanh.pop %v692
    %v700 = vmul.f32 %v698, %v436
    %702 = vrot.lane.b32.xlu0 %v699, 64
    %v703 = vpop.permute.xlu0 %702
    %v705 = vmul.f32 %v698, %v703
    %707 = vrot.lane.b32.xlu0 %v705, 32
    %v708 = vpop.permute.xlu0 %707
    %v710 = vadd.f32 %v700, %v708
    %v711 = vtanh.pop %v710
    %713 = vrot.lane.b32.xlu0 %v711, 64
    %v714 = vpop.permute.xlu0 %713
    %v716 = vmul.f32 %v698, %v714
    %718 = vrot.lane.b32.xlu0 %v716, 32
    %v719 = vpop.permute.xlu0 %718
    %721 = vst.msk [vmem:[#allocation3 + $0x1] sm:$0x1] %vm447, %v719
    %v722 = vld [vmem:[#allocation2 + $0x2] sm:$0x1]
    %723 = vmatprep.subr.mxu0 0.0
    %724 = vmatpush1.msra.mxu0 0.0
    %725 = vmatprep.subr.mxu0 0.0
    %726 = vmatpush1.msra.mxu0 0.0
    %727 = vmatprep.subr.mxu0 0.0
    %728 = vmatpush1.msra.mxu0 0.0
    %729 = vmatprep.subr.mxu0 0.0
    %730 = vmatpush1.msra.mxu0 0.0
    %731 = vmatprep.subr.mxu0 0.0
    %732 = vmatpush1.msra.mxu0 0.0
    %733 = vmatprep.subr.mxu0 0.0
    %734 = vmatpush1.msra.mxu0 0.0
    %735 = vmatprep.subr.mxu0 0.0
    %736 = vmatpush1.msra.mxu0 0.0
    %737 = vmatprep.subr.mxu0 0.0
    %738 = vmatpush1.msra.mxu0 0.0
    %739 = vmatprep.subr.mxu0 0.0
    %740 = vmatpush1.msra.mxu0 0.0
    %741 = vmatprep.subr.mxu0 0.0
    %742 = vmatpush1.msra.mxu0 0.0
    %743 = vmatprep.subr.mxu0 0.0
    %744 = vmatpush1.msra.mxu0 0.0
    %745 = vmatprep.subr.mxu0 0.0
    %746 = vmatpush1.msra.mxu0 0.0
    %747 = vmatprep.subr.mxu0 0.0
    %748 = vmatpush1.msra.mxu0 %v164
    %749 = vmatprep.subr.mxu0 0.0
    %750 = vmatpush1.msra.mxu0 %v163
    %751 = vmatprep.subr.mxu0 0.0
    %752 = vmatpush1.msra.mxu0 %v162
    %753 = vmatprep.subr.mxu0 0.0
    %754 = vmatpush1.msra.mxu0 %v161
    %755 = vmatprep.subr.mxu0 0.0
    %756 = vmatpush2.msra.mxu0 0.0
    %757 = vmatprep.subr.mxu0 0.0
    %758 = vmatpush2.msra.mxu0 0.0
    %759 = vmatprep.subr.mxu0 0.0
    %760 = vmatpush2.msra.mxu0 0.0
    %761 = vmatprep.subr.mxu0 0.0
    %762 = vmatpush2.msra.mxu0 0.0
    %763 = vmatprep.subr.mxu0 0.0
    %764 = vmatpush2.msra.mxu0 0.0
    %765 = vmatprep.subr.mxu0 0.0
    %766 = vmatpush2.msra.mxu0 0.0
    %767 = vmatprep.subr.mxu0 0.0
    %768 = vmatpush2.msra.mxu0 0.0
    %769 = vmatprep.subr.mxu0 0.0
    %770 = vmatpush2.msra.mxu0 0.0
    %771 = vmatprep.subr.mxu0 0.0
    %772 = vmatpush2.msra.mxu0 0.0
    %773 = vmatprep.subr.mxu0 0.0
    %774 = vmatpush2.msra.mxu0 0.0
    %775 = vmatprep.subr.mxu0 0.0
    %776 = vmatpush2.msra.mxu0 0.0
    %777 = vmatprep.subr.mxu0 0.0
    %778 = vmatpush2.msra.mxu0 0.0
    %779 = vmatprep.subr.mxu0 0.0
    %780 = vmatpush2.msra.mxu0 0.0
    %781 = vmatprep.subr.mxu0 0.0
    %782 = vmatpush2.msra.mxu0 0.0
    %783 = vmatprep.subr.mxu0 0.0
    %784 = vmatpush2.msra.mxu0 0.0
    %785 = vmatprep.subr.mxu0 0.0
    %786 = vmatpush2.msra.mxu0 0.0
    %787 = vmatprep.mubr.f32.mxu0 0.0
    %788 = vmatmul.mubr.f32.gmra.mxu0 %v620
    %v789 = vpop.f32.mrf.mxu0
    %v790 = vadd.f32 0.0, %v789
    %v791 = vpop.f32.mrf.mxu0
    %792 = vdwg.mxu0
    %v793 = vadd.f32 %v722, %v790
    %v794 = vxor.u32 %v793, 2147483648
    %v795 = vmul.f32 %v794, 1.442695
    %v796 = vpow.pop %v795
    %v797 = vadd.f32 %v796, 1.0
    %v798 = vrcp.pop %v797
    %v799 = vmul.f32 1.0, %v798
    %v800 = vtanh.pop %v793
    %v801 = vmul.f32 %v799, %v538
    %803 = vrot.lane.b32.xlu0 %v800, 64
    %v804 = vpop.permute.xlu0 %803
    %v806 = vmul.f32 %v799, %v804
    %808 = vrot.lane.b32.xlu0 %v806, 32
    %v809 = vpop.permute.xlu0 %808
    %v811 = vadd.f32 %v801, %v809
    %v812 = vtanh.pop %v811
    %814 = vrot.lane.b32.xlu0 %v812, 64
    %v815 = vpop.permute.xlu0 %814
    %v817 = vmul.f32 %v799, %v815
    %v818 = vsel %vm86, %v719, 0
    %820 = vmatprep.subr.mxu0 0.0
    %821 = vmatpush1.msra.mxu0 0.0
    %822 = vmatprep.subr.mxu0 0.0
    %823 = vmatpush1.msra.mxu0 0.0
    %824 = vmatprep.subr.mxu0 0.0
    %825 = vmatpush1.msra.mxu0 0.0
    %826 = vmatprep.subr.mxu0 0.0
    %827 = vmatpush1.msra.mxu0 0.0
    %828 = vmatprep.subr.mxu0 0.0
    %829 = vmatpush1.msra.mxu0 0.0
    %830 = vmatprep.subr.mxu0 0.0
    %831 = vmatpush1.msra.mxu0 0.0
    %832 = vmatprep.subr.mxu0 0.0
    %833 = vmatpush1.msra.mxu0 0.0
    %834 = vmatprep.subr.mxu0 0.0
    %835 = vmatpush1.msra.mxu0 0.0
    %836 = vmatprep.subr.mxu0 0.0
    %837 = vmatpush1.msra.mxu0 0.0
    %838 = vmatprep.subr.mxu0 0.0
    %839 = vmatpush1.msra.mxu0 0.0
    %840 = vmatprep.subr.mxu0 0.0
    %841 = vmatpush1.msra.mxu0 0.0
    %842 = vmatprep.subr.mxu0 0.0
    %843 = vmatpush1.msra.mxu0 0.0
    %844 = vmatprep.subr.mxu0 0.0
    %845 = vmatpush1.msra.mxu0 %v172
    %846 = vmatprep.subr.mxu0 0.0
    %847 = vmatpush1.msra.mxu0 %v171
    %848 = vmatprep.subr.mxu0 0.0
    %849 = vmatpush1.msra.mxu0 %v170
    %850 = vmatprep.subr.mxu0 0.0
    %851 = vmatpush1.msra.mxu0 %v169
    %852 = vmatprep.subr.mxu0 0.0
    %853 = vmatpush2.msra.mxu0 0.0
    %854 = vmatprep.subr.mxu0 0.0
    %855 = vmatpush2.msra.mxu0 0.0
    %856 = vmatprep.subr.mxu0 0.0
    %857 = vmatpush2.msra.mxu0 0.0
    %858 = vmatprep.subr.mxu0 0.0
    %859 = vmatpush2.msra.mxu0 0.0
    %860 = vmatprep.subr.mxu0 0.0
    %861 = vmatpush2.msra.mxu0 0.0
    %862 = vmatprep.subr.mxu0 0.0
    %863 = vmatpush2.msra.mxu0 0.0
    %864 = vmatprep.subr.mxu0 0.0
    %865 = vmatpush2.msra.mxu0 0.0
    %866 = vmatprep.subr.mxu0 0.0
    %867 = vmatpush2.msra.mxu0 0.0
    %868 = vmatprep.subr.mxu0 0.0
    %869 = vmatpush2.msra.mxu0 0.0
    %870 = vmatprep.subr.mxu0 0.0
    %871 = vmatpush2.msra.mxu0 0.0
    %872 = vmatprep.subr.mxu0 0.0
    %873 = vmatpush2.msra.mxu0 0.0
    %874 = vmatprep.subr.mxu0 0.0
    %875 = vmatpush2.msra.mxu0 0.0
    %876 = vmatprep.subr.mxu0 0.0
    %877 = vmatpush2.msra.mxu0 0.0
    %878 = vmatprep.subr.mxu0 0.0
    %879 = vmatpush2.msra.mxu0 0.0
    %880 = vmatprep.subr.mxu0 0.0
    %881 = vmatpush2.msra.mxu0 0.0
    %882 = vmatprep.subr.mxu0 0.0
    %883 = vmatpush2.msra.mxu0 0.0
    %884 = vmatprep.mubr.f32.mxu0 0.0
    %885 = vmatmul.mubr.f32.gmra.mxu0 %v818
    %v886 = vpop.f32.mrf.mxu0
    %v887 = vadd.f32 0.0, %v886
    %v888 = vpop.f32.mrf.mxu0
    %889 = vdwg.mxu0
    %891 = vrot.lane.b32.xlu0 %v817, 32
    %v892 = vpop.permute.xlu0 %891
    %v893 = vsel %vm86, %v892, 0
    %895 = vmatprep.subr.mxu0 0.0
    %896 = vmatpush1.msra.mxu0 0.0
    %897 = vmatprep.subr.mxu0 0.0
    %898 = vmatpush1.msra.mxu0 0.0
    %899 = vmatprep.subr.mxu0 0.0
    %900 = vmatpush1.msra.mxu0 0.0
    %901 = vmatprep.subr.mxu0 0.0
    %902 = vmatpush1.msra.mxu0 0.0
    %903 = vmatprep.subr.mxu0 0.0
    %904 = vmatpush1.msra.mxu0 0.0
    %905 = vmatprep.subr.mxu0 0.0
    %906 = vmatpush1.msra.mxu0 0.0
    %907 = vmatprep.subr.mxu0 0.0
    %908 = vmatpush1.msra.mxu0 0.0
    %909 = vmatprep.subr.mxu0 0.0
    %910 = vmatpush1.msra.mxu0 0.0
    %911 = vmatprep.subr.mxu0 0.0
    %912 = vmatpush1.msra.mxu0 0.0
    %913 = vmatprep.subr.mxu0 0.0
    %914 = vmatpush1.msra.mxu0 0.0
    %915 = vmatprep.subr.mxu0 0.0
    %916 = vmatpush1.msra.mxu0 0.0
    %917 = vmatprep.subr.mxu0 0.0
    %918 = vmatpush1.msra.mxu0 0.0
    %919 = vmatprep.subr.mxu0 0.0
    %920 = vmatpush1.msra.mxu0 %v168
    %921 = vmatprep.subr.mxu0 0.0
    %922 = vmatpush1.msra.mxu0 %v167
    %923 = vmatprep.subr.mxu0 0.0
    %924 = vmatpush1.msra.mxu0 %v166
    %925 = vmatprep.subr.mxu0 0.0
    %926 = vmatpush1.msra.mxu0 %v165
    %927 = vmatprep.subr.mxu0 0.0
    %928 = vmatpush2.msra.mxu0 0.0
    %929 = vmatprep.subr.mxu0 0.0
    %930 = vmatpush2.msra.mxu0 0.0
    %931 = vmatprep.subr.mxu0 0.0
    %932 = vmatpush2.msra.mxu0 0.0
    %933 = vmatprep.subr.mxu0 0.0
    %934 = vmatpush2.msra.mxu0 0.0
    %935 = vmatprep.subr.mxu0 0.0
    %936 = vmatpush2.msra.mxu0 0.0
    %937 = vmatprep.subr.mxu0 0.0
    %938 = vmatpush2.msra.mxu0 0.0
    %939 = vmatprep.subr.mxu0 0.0
    %940 = vmatpush2.msra.mxu0 0.0
    %941 = vmatprep.subr.mxu0 0.0
    %942 = vmatpush2.msra.mxu0 0.0
    %943 = vmatprep.subr.mxu0 0.0
    %944 = vmatpush2.msra.mxu0 0.0
    %945 = vmatprep.subr.mxu0 0.0
    %946 = vmatpush2.msra.mxu0 0.0
    %947 = vmatprep.subr.mxu0 0.0
    %948 = vmatpush2.msra.mxu0 0.0
    %949 = vmatprep.subr.mxu0 0.0
    %950 = vmatpush2.msra.mxu0 0.0
    %951 = vmatprep.subr.mxu0 0.0
    %952 = vmatpush2.msra.mxu0 0.0
    %953 = vmatprep.subr.mxu0 0.0
    %954 = vmatpush2.msra.mxu0 0.0
    %955 = vmatprep.subr.mxu0 0.0
    %956 = vmatpush2.msra.mxu0 0.0
    %957 = vmatprep.subr.mxu0 0.0
    %958 = vmatpush2.msra.mxu0 0.0
    %959 = vmatprep.mubr.f32.mxu0 0.0
    %960 = vmatmul.mubr.f32.gmra.mxu0 %v893
    %v961 = vpop.f32.mrf.mxu0
    %v962 = vadd.f32 %v887, %v961
    %v963 = vpop.f32.mrf.mxu0
    %964 = vdwg.mxu0
    %v965 = vadd.f32 %v962, %v173
    %v966 = vxor.u32 %v965, 2147483648
    %v967 = vmul.f32 %v966, 1.442695
    %v968 = vpow.pop %v967
    %v969 = vadd.f32 %v968, 1.0
    %v970 = vrcp.pop %v969
    %v971 = vmul.f32 1.0, %v970
    %v972 = vtanh.pop %v965
    %v973 = vmul.f32 %v971, %v710
    %975 = vrot.lane.b32.xlu0 %v972, 64
    %v976 = vpop.permute.xlu0 %975
    %v978 = vmul.f32 %v971, %v976
    %980 = vrot.lane.b32.xlu0 %v978, 32
    %v981 = vpop.permute.xlu0 %980
    %v983 = vadd.f32 %v973, %v981
    %v984 = vtanh.pop %v983
    %986 = vrot.lane.b32.xlu0 %v984, 64
    %v987 = vpop.permute.xlu0 %986
    %v989 = vmul.f32 %v971, %v987
    %991 = vrot.lane.b32.xlu0 %v989, 32
    %v992 = vpop.permute.xlu0 %991
    %994 = vst.msk [vmem:[#allocation3 + $0x2] sm:$0x1] %vm447, %v992
    %v995 = vld [vmem:[#allocation2 + $0x3] sm:$0x1]
    %996 = vmatprep.subr.mxu0 0.0
    %997 = vmatpush1.msra.mxu0 0.0
    %998 = vmatprep.subr.mxu0 0.0
    %999 = vmatpush1.msra.mxu0 0.0
    %1000 = vmatprep.subr.mxu0 0.0
    %1001 = vmatpush1.msra.mxu0 0.0
    %1002 = vmatprep.subr.mxu0 0.0
    %1003 = vmatpush1.msra.mxu0 0.0
    %1004 = vmatprep.subr.mxu0 0.0
    %1005 = vmatpush1.msra.mxu0 0.0
    %1006 = vmatprep.subr.mxu0 0.0
    %1007 = vmatpush1.msra.mxu0 0.0
    %1008 = vmatprep.subr.mxu0 0.0
    %1009 = vmatpush1.msra.mxu0 0.0
    %1010 = vmatprep.subr.mxu0 0.0
    %1011 = vmatpush1.msra.mxu0 0.0
    %1012 = vmatprep.subr.mxu0 0.0
    %1013 = vmatpush1.msra.mxu0 0.0
    %1014 = vmatprep.subr.mxu0 0.0
    %1015 = vmatpush1.msra.mxu0 0.0
    %1016 = vmatprep.subr.mxu0 0.0
    %1017 = vmatpush1.msra.mxu0 0.0
    %1018 = vmatprep.subr.mxu0 0.0
    %1019 = vmatpush1.msra.mxu0 0.0
    %1020 = vmatprep.subr.mxu0 0.0
    %1021 = vmatpush1.msra.mxu0 %v164
    %1022 = vmatprep.subr.mxu0 0.0
    %1023 = vmatpush1.msra.mxu0 %v163
    %1024 = vmatprep.subr.mxu0 0.0
    %1025 = vmatpush1.msra.mxu0 %v162
    %1026 = vmatprep.subr.mxu0 0.0
    %1027 = vmatpush1.msra.mxu0 %v161
    %1028 = vmatprep.subr.mxu0 0.0
    %1029 = vmatpush2.msra.mxu0 0.0
    %1030 = vmatprep.subr.mxu0 0.0
    %1031 = vmatpush2.msra.mxu0 0.0
    %1032 = vmatprep.subr.mxu0 0.0
    %1033 = vmatpush2.msra.mxu0 0.0
    %1034 = vmatprep.subr.mxu0 0.0
    %1035 = vmatpush2.msra.mxu0 0.0
    %1036 = vmatprep.subr.mxu0 0.0
    %1037 = vmatpush2.msra.mxu0 0.0
    %1038 = vmatprep.subr.mxu0 0.0
    %1039 = vmatpush2.msra.mxu0 0.0
    %1040 = vmatprep.subr.mxu0 0.0
    %1041 = vmatpush2.msra.mxu0 0.0
    %1042 = vmatprep.subr.mxu0 0.0
    %1043 = vmatpush2.msra.mxu0 0.0
    %1044 = vmatprep.subr.mxu0 0.0
    %1045 = vmatpush2.msra.mxu0 0.0
    %1046 = vmatprep.subr.mxu0 0.0
    %1047 = vmatpush2.msra.mxu0 0.0
    %1048 = vmatprep.subr.mxu0 0.0
    %1049 = vmatpush2.msra.mxu0 0.0
    %1050 = vmatprep.subr.mxu0 0.0
    %1051 = vmatpush2.msra.mxu0 0.0
    %1052 = vmatprep.subr.mxu0 0.0
    %1053 = vmatpush2.msra.mxu0 0.0
    %1054 = vmatprep.subr.mxu0 0.0
    %1055 = vmatpush2.msra.mxu0 0.0
    %1056 = vmatprep.subr.mxu0 0.0
    %1057 = vmatpush2.msra.mxu0 0.0
    %1058 = vmatprep.subr.mxu0 0.0
    %1059 = vmatpush2.msra.mxu0 0.0
    %1060 = vmatprep.mubr.f32.mxu0 0.0
    %1061 = vmatmul.mubr.f32.gmra.mxu0 %v893
    %v1062 = vpop.f32.mrf.mxu0
    %v1063 = vadd.f32 0.0, %v1062
    %v1064 = vpop.f32.mrf.mxu0
    %1065 = vdwg.mxu0
    %v1066 = vadd.f32 %v995, %v1063
    %v1067 = vxor.u32 %v1066, 2147483648
    %v1068 = vmul.f32 %v1067, 1.442695
    %v1069 = vpow.pop %v1068
    %v1070 = vadd.f32 %v1069, 1.0
    %v1071 = vrcp.pop %v1070
    %v1072 = vmul.f32 1.0, %v1071
    %v1073 = vtanh.pop %v1066
    %v1074 = vmul.f32 %v1072, %v811
    %1076 = vrot.lane.b32.xlu0 %v1073, 64
    %v1077 = vpop.permute.xlu0 %1076
    %v1079 = vmul.f32 %v1072, %v1077
    %1081 = vrot.lane.b32.xlu0 %v1079, 32
    %v1082 = vpop.permute.xlu0 %1081
    %v1084 = vadd.f32 %v1074, %v1082
    %v1085 = vtanh.pop %v1084
    %1087 = vrot.lane.b32.xlu0 %v1085, 64
    %v1088 = vpop.permute.xlu0 %1087
    %v1090 = vmul.f32 %v1072, %v1088
    %v1091 = vsel %vm86, %v992, 0
    %1093 = vmatprep.subr.mxu0 0.0
    %1094 = vmatpush1.msra.mxu0 0.0
    %1095 = vmatprep.subr.mxu0 0.0
    %1096 = vmatpush1.msra.mxu0 0.0
    %1097 = vmatprep.subr.mxu0 0.0
    %1098 = vmatpush1.msra.mxu0 0.0
    %1099 = vmatprep.subr.mxu0 0.0
    %1100 = vmatpush1.msra.mxu0 0.0
    %1101 = vmatprep.subr.mxu0 0.0
    %1102 = vmatpush1.msra.mxu0 0.0
    %1103 = vmatprep.subr.mxu0 0.0
    %1104 = vmatpush1.msra.mxu0 0.0
    %1105 = vmatprep.subr.mxu0 0.0
    %1106 = vmatpush1.msra.mxu0 0.0
    %1107 = vmatprep.subr.mxu0 0.0
    %1108 = vmatpush1.msra.mxu0 0.0
    %1109 = vmatprep.subr.mxu0 0.0
    %1110 = vmatpush1.msra.mxu0 0.0
    %1111 = vmatprep.subr.mxu0 0.0
    %1112 = vmatpush1.msra.mxu0 0.0
    %1113 = vmatprep.subr.mxu0 0.0
    %1114 = vmatpush1.msra.mxu0 0.0
    %1115 = vmatprep.subr.mxu0 0.0
    %1116 = vmatpush1.msra.mxu0 0.0
    %1117 = vmatprep.subr.mxu0 0.0
    %1118 = vmatpush1.msra.mxu0 %v172
    %1119 = vmatprep.subr.mxu0 0.0
    %1120 = vmatpush1.msra.mxu0 %v171
    %1121 = vmatprep.subr.mxu0 0.0
    %1122 = vmatpush1.msra.mxu0 %v170
    %1123 = vmatprep.subr.mxu0 0.0
    %1124 = vmatpush1.msra.mxu0 %v169
    %1125 = vmatprep.subr.mxu0 0.0
    %1126 = vmatpush2.msra.mxu0 0.0
    %1127 = vmatprep.subr.mxu0 0.0
    %1128 = vmatpush2.msra.mxu0 0.0
    %1129 = vmatprep.subr.mxu0 0.0
    %1130 = vmatpush2.msra.mxu0 0.0
    %1131 = vmatprep.subr.mxu0 0.0
    %1132 = vmatpush2.msra.mxu0 0.0
    %1133 = vmatprep.subr.mxu0 0.0
    %1134 = vmatpush2.msra.mxu0 0.0
    %1135 = vmatprep.subr.mxu0 0.0
    %1136 = vmatpush2.msra.mxu0 0.0
    %1137 = vmatprep.subr.mxu0 0.0
    %1138 = vmatpush2.msra.mxu0 0.0
    %1139 = vmatprep.subr.mxu0 0.0
    %1140 = vmatpush2.msra.mxu0 0.0
    %1141 = vmatprep.subr.mxu0 0.0
    %1142 = vmatpush2.msra.mxu0 0.0
    %1143 = vmatprep.subr.mxu0 0.0
    %1144 = vmatpush2.msra.mxu0 0.0
    %1145 = vmatprep.subr.mxu0 0.0
    %1146 = vmatpush2.msra.mxu0 0.0
    %1147 = vmatprep.subr.mxu0 0.0
    %1148 = vmatpush2.msra.mxu0 0.0
    %1149 = vmatprep.subr.mxu0 0.0
    %1150 = vmatpush2.msra.mxu0 0.0
    %1151 = vmatprep.subr.mxu0 0.0
    %1152 = vmatpush2.msra.mxu0 0.0
    %1153 = vmatprep.subr.mxu0 0.0
    %1154 = vmatpush2.msra.mxu0 0.0
    %1155 = vmatprep.subr.mxu0 0.0
    %1156 = vmatpush2.msra.mxu0 0.0
    %1157 = vmatprep.mubr.f32.mxu0 0.0
    %1158 = vmatmul.mubr.f32.gmra.mxu0 %v1091
    %v1159 = vpop.f32.mrf.mxu0
    %v1160 = vadd.f32 0.0, %v1159
    %v1161 = vpop.f32.mrf.mxu0
    %1162 = vdwg.mxu0
    %1164 = vrot.lane.b32.xlu0 %v1090, 32
    %v1165 = vpop.permute.xlu0 %1164
    %v1166 = vsel %vm86, %v1165, 0
    %1168 = vmatprep.subr.mxu0 0.0
    %1169 = vmatpush1.msra.mxu0 0.0
    %1170 = vmatprep.subr.mxu0 0.0
    %1171 = vmatpush1.msra.mxu0 0.0
    %1172 = vmatprep.subr.mxu0 0.0
    %1173 = vmatpush1.msra.mxu0 0.0
    %1174 = vmatprep.subr.mxu0 0.0
    %1175 = vmatpush1.msra.mxu0 0.0
    %1176 = vmatprep.subr.mxu0 0.0
    %1177 = vmatpush1.msra.mxu0 0.0
    %1178 = vmatprep.subr.mxu0 0.0
    %1179 = vmatpush1.msra.mxu0 0.0
    %1180 = vmatprep.subr.mxu0 0.0
    %1181 = vmatpush1.msra.mxu0 0.0
    %1182 = vmatprep.subr.mxu0 0.0
    %1183 = vmatpush1.msra.mxu0 0.0
    %1184 = vmatprep.subr.mxu0 0.0
    %1185 = vmatpush1.msra.mxu0 0.0
    %1186 = vmatprep.subr.mxu0 0.0
    %1187 = vmatpush1.msra.mxu0 0.0
    %1188 = vmatprep.subr.mxu0 0.0
    %1189 = vmatpush1.msra.mxu0 0.0
    %1190 = vmatprep.subr.mxu0 0.0
    %1191 = vmatpush1.msra.mxu0 0.0
    %1192 = vmatprep.subr.mxu0 0.0
    %1193 = vmatpush1.msra.mxu0 %v168
    %1194 = vmatprep.subr.mxu0 0.0
    %1195 = vmatpush1.msra.mxu0 %v167
    %1196 = vmatprep.subr.mxu0 0.0
    %1197 = vmatpush1.msra.mxu0 %v166
    %1198 = vmatprep.subr.mxu0 0.0
    %1199 = vmatpush1.msra.mxu0 %v165
    %1200 = vmatprep.subr.mxu0 0.0
    %1201 = vmatpush2.msra.mxu0 0.0
    %1202 = vmatprep.subr.mxu0 0.0
    %1203 = vmatpush2.msra.mxu0 0.0
    %1204 = vmatprep.subr.mxu0 0.0
    %1205 = vmatpush2.msra.mxu0 0.0
    %1206 = vmatprep.subr.mxu0 0.0
    %1207 = vmatpush2.msra.mxu0 0.0
    %1208 = vmatprep.subr.mxu0 0.0
    %1209 = vmatpush2.msra.mxu0 0.0
    %1210 = vmatprep.subr.mxu0 0.0
    %1211 = vmatpush2.msra.mxu0 0.0
    %1212 = vmatprep.subr.mxu0 0.0
    %1213 = vmatpush2.msra.mxu0 0.0
    %1214 = vmatprep.subr.mxu0 0.0
    %1215 = vmatpush2.msra.mxu0 0.0
    %1216 = vmatprep.subr.mxu0 0.0
    %1217 = vmatpush2.msra.mxu0 0.0
    %1218 = vmatprep.subr.mxu0 0.0
    %1219 = vmatpush2.msra.mxu0 0.0
    %1220 = vmatprep.subr.mxu0 0.0
    %1221 = vmatpush2.msra.mxu0 0.0
    %1222 = vmatprep.subr.mxu0 0.0
    %1223 = vmatpush2.msra.mxu0 0.0
    %1224 = vmatprep.subr.mxu0 0.0
    %1225 = vmatpush2.msra.mxu0 0.0
    %1226 = vmatprep.subr.mxu0 0.0
    %1227 = vmatpush2.msra.mxu0 0.0
    %1228 = vmatprep.subr.mxu0 0.0
    %1229 = vmatpush2.msra.mxu0 0.0
    %1230 = vmatprep.subr.mxu0 0.0
    %1231 = vmatpush2.msra.mxu0 0.0
    %1232 = vmatprep.mubr.f32.mxu0 0.0
    %1233 = vmatmul.mubr.f32.gmra.mxu0 %v1166
    %v1234 = vpop.f32.mrf.mxu0
    %v1235 = vadd.f32 %v1160, %v1234
    %v1236 = vpop.f32.mrf.mxu0
    %1237 = vdwg.mxu0
    %v1238 = vadd.f32 %v1235, %v173
    %v1239 = vxor.u32 %v1238, 2147483648
    %v1240 = vmul.f32 %v1239, 1.442695
    %v1241 = vpow.pop %v1240
    %v1242 = vadd.f32 %v1241, 1.0
    %v1243 = vrcp.pop %v1242
    %v1244 = vmul.f32 1.0, %v1243
    %v1245 = vtanh.pop %v1238
    %v1246 = vmul.f32 %v1244, %v983
    %1248 = vrot.lane.b32.xlu0 %v1245, 64
    %v1249 = vpop.permute.xlu0 %1248
    %v1251 = vmul.f32 %v1244, %v1249
    %1253 = vrot.lane.b32.xlu0 %v1251, 32
    %v1254 = vpop.permute.xlu0 %1253
    %v1256 = vadd.f32 %v1246, %v1254
    %v1257 = vtanh.pop %v1256
    %1259 = vrot.lane.b32.xlu0 %v1257, 64
    %v1260 = vpop.permute.xlu0 %1259
    %v1262 = vmul.f32 %v1244, %v1260
    %1264 = vrot.lane.b32.xlu0 %v1262, 32
    %v1265 = vpop.permute.xlu0 %1264
    %1267 = vst.msk [vmem:[#allocation3 + $0x3] sm:$0x1] %vm447, %v1265
    %v1268 = vld [vmem:[#allocation2 + $0x4] sm:$0x1]
    %1269 = vmatprep.subr.mxu0 0.0
    %1270 = vmatpush1.msra.mxu0 0.0
    %1271 = vmatprep.subr.mxu0 0.0
    %1272 = vmatpush1.msra.mxu0 0.0
    %1273 = vmatprep.subr.mxu0 0.0
    %1274 = vmatpush1.msra.mxu0 0.0
    %1275 = vmatprep.subr.mxu0 0.0
    %1276 = vmatpush1.msra.mxu0 0.0
    %1277 = vmatprep.subr.mxu0 0.0
    %1278 = vmatpush1.msra.mxu0 0.0
    %1279 = vmatprep.subr.mxu0 0.0
    %1280 = vmatpush1.msra.mxu0 0.0
    %1281 = vmatprep.subr.mxu0 0.0
    %1282 = vmatpush1.msra.mxu0 0.0
    %1283 = vmatprep.subr.mxu0 0.0
    %1284 = vmatpush1.msra.mxu0 0.0
    %1285 = vmatprep.subr.mxu0 0.0
    %1286 = vmatpush1.msra.mxu0 0.0
    %1287 = vmatprep.subr.mxu0 0.0
    %1288 = vmatpush1.msra.mxu0 0.0
    %1289 = vmatprep.subr.mxu0 0.0
    %1290 = vmatpush1.msra.mxu0 0.0
    %1291 = vmatprep.subr.mxu0 0.0
    %1292 = vmatpush1.msra.mxu0 0.0
    %1293 = vmatprep.subr.mxu0 0.0
    %1294 = vmatpush1.msra.mxu0 %v164
    %1295 = vmatprep.subr.mxu0 0.0
    %1296 = vmatpush1.msra.mxu0 %v163
    %1297 = vmatprep.subr.mxu0 0.0
    %1298 = vmatpush1.msra.mxu0 %v162
    %1299 = vmatprep.subr.mxu0 0.0
    %1300 = vmatpush1.msra.mxu0 %v161
    %1301 = vmatprep.subr.mxu0 0.0
    %1302 = vmatpush2.msra.mxu0 0.0
    %1303 = vmatprep.subr.mxu0 0.0
    %1304 = vmatpush2.msra.mxu0 0.0
    %1305 = vmatprep.subr.mxu0 0.0
    %1306 = vmatpush2.msra.mxu0 0.0
    %1307 = vmatprep.subr.mxu0 0.0
    %1308 = vmatpush2.msra.mxu0 0.0
    %1309 = vmatprep.subr.mxu0 0.0
    %1310 = vmatpush2.msra.mxu0 0.0
    %1311 = vmatprep.subr.mxu0 0.0
    %1312 = vmatpush2.msra.mxu0 0.0
    %1313 = vmatprep.subr.mxu0 0.0
    %1314 = vmatpush2.msra.mxu0 0.0
    %1315 = vmatprep.subr.mxu0 0.0
    %1316 = vmatpush2.msra.mxu0 0.0
    %1317 = vmatprep.subr.mxu0 0.0
    %1318 = vmatpush2.msra.mxu0 0.0
    %1319 = vmatprep.subr.mxu0 0.0
    %1320 = vmatpush2.msra.mxu0 0.0
    %1321 = vmatprep.subr.mxu0 0.0
    %1322 = vmatpush2.msra.mxu0 0.0
    %1323 = vmatprep.subr.mxu0 0.0
    %1324 = vmatpush2.msra.mxu0 0.0
    %1325 = vmatprep.subr.mxu0 0.0
    %1326 = vmatpush2.msra.mxu0 0.0
    %1327 = vmatprep.subr.mxu0 0.0
    %1328 = vmatpush2.msra.mxu0 0.0
    %1329 = vmatprep.subr.mxu0 0.0
    %1330 = vmatpush2.msra.mxu0 0.0
    %1331 = vmatprep.subr.mxu0 0.0
    %1332 = vmatpush2.msra.mxu0 0.0
    %1333 = vmatprep.mubr.f32.mxu0 0.0
    %1334 = vmatmul.mubr.f32.gmra.mxu0 %v1166
    %v1335 = vpop.f32.mrf.mxu0
    %v1336 = vadd.f32 0.0, %v1335
    %v1337 = vpop.f32.mrf.mxu0
    %1338 = vdwg.mxu0
    %v1339 = vadd.f32 %v1268, %v1336
    %v1340 = vxor.u32 %v1339, 2147483648
    %v1341 = vmul.f32 %v1340, 1.442695
    %v1342 = vpow.pop %v1341
    %v1343 = vadd.f32 %v1342, 1.0
    %v1344 = vrcp.pop %v1343
    %v1345 = vmul.f32 1.0, %v1344
    %v1346 = vtanh.pop %v1339
    %v1347 = vmul.f32 %v1345, %v1084
    %1349 = vrot.lane.b32.xlu0 %v1346, 64
    %v1350 = vpop.permute.xlu0 %1349
    %v1352 = vmul.f32 %v1345, %v1350
    %1354 = vrot.lane.b32.xlu0 %v1352, 32
    %v1355 = vpop.permute.xlu0 %1354
    %v1357 = vadd.f32 %v1347, %v1355
    %v1358 = vtanh.pop %v1357
    %1360 = vrot.lane.b32.xlu0 %v1358, 64
    %v1361 = vpop.permute.xlu0 %1360
    %v1363 = vmul.f32 %v1345, %v1361
    %v1364 = vsel %vm86, %v1265, 0
    %1366 = vmatprep.subr.mxu0 0.0
    %1367 = vmatpush1.msra.mxu0 0.0
    %1368 = vmatprep.subr.mxu0 0.0
    %1369 = vmatpush1.msra.mxu0 0.0
    %1370 = vmatprep.subr.mxu0 0.0
    %1371 = vmatpush1.msra.mxu0 0.0
    %1372 = vmatprep.subr.mxu0 0.0
    %1373 = vmatpush1.msra.mxu0 0.0
    %1374 = vmatprep.subr.mxu0 0.0
    %1375 = vmatpush1.msra.mxu0 0.0
    %1376 = vmatprep.subr.mxu0 0.0
    %1377 = vmatpush1.msra.mxu0 0.0
    %1378 = vmatprep.subr.mxu0 0.0
    %1379 = vmatpush1.msra.mxu0 0.0
    %1380 = vmatprep.subr.mxu0 0.0
    %1381 = vmatpush1.msra.mxu0 0.0
    %1382 = vmatprep.subr.mxu0 0.0
    %1383 = vmatpush1.msra.mxu0 0.0
    %1384 = vmatprep.subr.mxu0 0.0
    %1385 = vmatpush1.msra.mxu0 0.0
    %1386 = vmatprep.subr.mxu0 0.0
    %1387 = vmatpush1.msra.mxu0 0.0
    %1388 = vmatprep.subr.mxu0 0.0
    %1389 = vmatpush1.msra.mxu0 0.0
    %1390 = vmatprep.subr.mxu0 0.0
    %1391 = vmatpush1.msra.mxu0 %v172
    %1392 = vmatprep.subr.mxu0 0.0
    %1393 = vmatpush1.msra.mxu0 %v171
    %1394 = vmatprep.subr.mxu0 0.0
    %1395 = vmatpush1.msra.mxu0 %v170
    %1396 = vmatprep.subr.mxu0 0.0
    %1397 = vmatpush1.msra.mxu0 %v169
    %1398 = vmatprep.subr.mxu0 0.0
    %1399 = vmatpush2.msra.mxu0 0.0
    %1400 = vmatprep.subr.mxu0 0.0
    %1401 = vmatpush2.msra.mxu0 0.0
    %1402 = vmatprep.subr.mxu0 0.0
    %1403 = vmatpush2.msra.mxu0 0.0
    %1404 = vmatprep.subr.mxu0 0.0
    %1405 = vmatpush2.msra.mxu0 0.0
    %1406 = vmatprep.subr.mxu0 0.0
    %1407 = vmatpush2.msra.mxu0 0.0
    %1408 = vmatprep.subr.mxu0 0.0
    %1409 = vmatpush2.msra.mxu0 0.0
    %1410 = vmatprep.subr.mxu0 0.0
    %1411 = vmatpush2.msra.mxu0 0.0
    %1412 = vmatprep.subr.mxu0 0.0
    %1413 = vmatpush2.msra.mxu0 0.0
    %1414 = vmatprep.subr.mxu0 0.0
    %1415 = vmatpush2.msra.mxu0 0.0
    %1416 = vmatprep.subr.mxu0 0.0
    %1417 = vmatpush2.msra.mxu0 0.0
    %1418 = vmatprep.subr.mxu0 0.0
    %1419 = vmatpush2.msra.mxu0 0.0
    %1420 = vmatprep.subr.mxu0 0.0
    %1421 = vmatpush2.msra.mxu0 0.0
    %1422 = vmatprep.subr.mxu0 0.0
    %1423 = vmatpush2.msra.mxu0 0.0
    %1424 = vmatprep.subr.mxu0 0.0
    %1425 = vmatpush2.msra.mxu0 0.0
    %1426 = vmatprep.subr.mxu0 0.0
    %1427 = vmatpush2.msra.mxu0 0.0
    %1428 = vmatprep.subr.mxu0 0.0
    %1429 = vmatpush2.msra.mxu0 0.0
    %1430 = vmatprep.mubr.f32.mxu0 0.0
    %1431 = vmatmul.mubr.f32.gmra.mxu0 %v1364
    %v1432 = vpop.f32.mrf.mxu0
    %v1433 = vadd.f32 0.0, %v1432
    %v1434 = vpop.f32.mrf.mxu0
    %1435 = vdwg.mxu0
    %1437 = vrot.lane.b32.xlu0 %v1363, 32
    %v1438 = vpop.permute.xlu0 %1437
    %v1439 = vsel %vm86, %v1438, 0
    %1441 = vmatprep.subr.mxu0 0.0
    %1442 = vmatpush1.msra.mxu0 0.0
    %1443 = vmatprep.subr.mxu0 0.0
    %1444 = vmatpush1.msra.mxu0 0.0
    %1445 = vmatprep.subr.mxu0 0.0
    %1446 = vmatpush1.msra.mxu0 0.0
    %1447 = vmatprep.subr.mxu0 0.0
    %1448 = vmatpush1.msra.mxu0 0.0
    %1449 = vmatprep.subr.mxu0 0.0
    %1450 = vmatpush1.msra.mxu0 0.0
    %1451 = vmatprep.subr.mxu0 0.0
    %1452 = vmatpush1.msra.mxu0 0.0
    %1453 = vmatprep.subr.mxu0 0.0
    %1454 = vmatpush1.msra.mxu0 0.0
    %1455 = vmatprep.subr.mxu0 0.0
    %1456 = vmatpush1.msra.mxu0 0.0
    %1457 = vmatprep.subr.mxu0 0.0
    %1458 = vmatpush1.msra.mxu0 0.0
    %1459 = vmatprep.subr.mxu0 0.0
    %1460 = vmatpush1.msra.mxu0 0.0
    %1461 = vmatprep.subr.mxu0 0.0
    %1462 = vmatpush1.msra.mxu0 0.0
    %1463 = vmatprep.subr.mxu0 0.0
    %1464 = vmatpush1.msra.mxu0 0.0
    %1465 = vmatprep.subr.mxu0 0.0
    %1466 = vmatpush1.msra.mxu0 %v168
    %1467 = vmatprep.subr.mxu0 0.0
    %1468 = vmatpush1.msra.mxu0 %v167
    %1469 = vmatprep.subr.mxu0 0.0
    %1470 = vmatpush1.msra.mxu0 %v166
    %1471 = vmatprep.subr.mxu0 0.0
    %1472 = vmatpush1.msra.mxu0 %v165
    %1473 = vmatprep.subr.mxu0 0.0
    %1474 = vmatpush2.msra.mxu0 0.0
    %1475 = vmatprep.subr.mxu0 0.0
    %1476 = vmatpush2.msra.mxu0 0.0
    %1477 = vmatprep.subr.mxu0 0.0
    %1478 = vmatpush2.msra.mxu0 0.0
    %1479 = vmatprep.subr.mxu0 0.0
    %1480 = vmatpush2.msra.mxu0 0.0
    %1481 = vmatprep.subr.mxu0 0.0
    %1482 = vmatpush2.msra.mxu0 0.0
    %1483 = vmatprep.subr.mxu0 0.0
    %1484 = vmatpush2.msra.mxu0 0.0
    %1485 = vmatprep.subr.mxu0 0.0
    %1486 = vmatpush2.msra.mxu0 0.0
    %1487 = vmatprep.subr.mxu0 0.0
    %1488 = vmatpush2.msra.mxu0 0.0
    %1489 = vmatprep.subr.mxu0 0.0
    %1490 = vmatpush2.msra.mxu0 0.0
    %1491 = vmatprep.subr.mxu0 0.0
    %1492 = vmatpush2.msra.mxu0 0.0
    %1493 = vmatprep.subr.mxu0 0.0
    %1494 = vmatpush2.msra.mxu0 0.0
    %1495 = vmatprep.subr.mxu0 0.0
    %1496 = vmatpush2.msra.mxu0 0.0
    %1497 = vmatprep.subr.mxu0 0.0
    %1498 = vmatpush2.msra.mxu0 0.0
    %1499 = vmatprep.subr.mxu0 0.0
    %1500 = vmatpush2.msra.mxu0 0.0
    %1501 = vmatprep.subr.mxu0 0.0
    %1502 = vmatpush2.msra.mxu0 0.0
    %1503 = vmatprep.subr.mxu0 0.0
    %1504 = vmatpush2.msra.mxu0 0.0
    %1505 = vmatprep.mubr.f32.mxu0 0.0
    %1506 = vmatmul.mubr.f32.gmra.mxu0 %v1439
    %v1507 = vpop.f32.mrf.mxu0
    %v1508 = vadd.f32 %v1433, %v1507
    %v1509 = vpop.f32.mrf.mxu0
    %1510 = vdwg.mxu0
    %v1511 = vadd.f32 %v1508, %v173
    %v1512 = vxor.u32 %v1511, 2147483648
    %v1513 = vmul.f32 %v1512, 1.442695
    %v1514 = vpow.pop %v1513
    %v1515 = vadd.f32 %v1514, 1.0
    %v1516 = vrcp.pop %v1515
    %v1517 = vmul.f32 1.0, %v1516
    %v1518 = vtanh.pop %v1511
    %v1519 = vmul.f32 %v1517, %v1256
    %1521 = vrot.lane.b32.xlu0 %v1518, 64
    %v1522 = vpop.permute.xlu0 %1521
    %v1524 = vmul.f32 %v1517, %v1522
    %1526 = vrot.lane.b32.xlu0 %v1524, 32
    %v1527 = vpop.permute.xlu0 %1526
    %v1529 = vadd.f32 %v1519, %v1527
    %v1530 = vtanh.pop %v1529
    %1532 = vrot.lane.b32.xlu0 %v1530, 64
    %v1533 = vpop.permute.xlu0 %1532
    %v1535 = vmul.f32 %v1517, %v1533
    %1537 = vrot.lane.b32.xlu0 %v1535, 32
    %v1538 = vpop.permute.xlu0 %1537
    %1540 = vst.msk [vmem:[#allocation3 + $0x4] sm:$0x1] %vm447, %v1538
    %v1541 = vld [vmem:[#allocation2 + $0x5] sm:$0x1]
    %1542 = vmatprep.subr.mxu0 0.0
    %1543 = vmatpush1.msra.mxu0 0.0
    %1544 = vmatprep.subr.mxu0 0.0
    %1545 = vmatpush1.msra.mxu0 0.0
    %1546 = vmatprep.subr.mxu0 0.0
    %1547 = vmatpush1.msra.mxu0 0.0
    %1548 = vmatprep.subr.mxu0 0.0
    %1549 = vmatpush1.msra.mxu0 0.0
    %1550 = vmatprep.subr.mxu0 0.0
    %1551 = vmatpush1.msra.mxu0 0.0
    %1552 = vmatprep.subr.mxu0 0.0
    %1553 = vmatpush1.msra.mxu0 0.0
    %1554 = vmatprep.subr.mxu0 0.0
    %1555 = vmatpush1.msra.mxu0 0.0
    %1556 = vmatprep.subr.mxu0 0.0
    %1557 = vmatpush1.msra.mxu0 0.0
    %1558 = vmatprep.subr.mxu0 0.0
    %1559 = vmatpush1.msra.mxu0 0.0
    %1560 = vmatprep.subr.mxu0 0.0
    %1561 = vmatpush1.msra.mxu0 0.0
    %1562 = vmatprep.subr.mxu0 0.0
    %1563 = vmatpush1.msra.mxu0 0.0
    %1564 = vmatprep.subr.mxu0 0.0
    %1565 = vmatpush1.msra.mxu0 0.0
    %1566 = vmatprep.subr.mxu0 0.0
    %1567 = vmatpush1.msra.mxu0 %v164
    %1568 = vmatprep.subr.mxu0 0.0
    %1569 = vmatpush1.msra.mxu0 %v163
    %1570 = vmatprep.subr.mxu0 0.0
    %1571 = vmatpush1.msra.mxu0 %v162
    %1572 = vmatprep.subr.mxu0 0.0
    %1573 = vmatpush1.msra.mxu0 %v161
    %1574 = vmatprep.subr.mxu0 0.0
    %1575 = vmatpush2.msra.mxu0 0.0
    %1576 = vmatprep.subr.mxu0 0.0
    %1577 = vmatpush2.msra.mxu0 0.0
    %1578 = vmatprep.subr.mxu0 0.0
    %1579 = vmatpush2.msra.mxu0 0.0
    %1580 = vmatprep.subr.mxu0 0.0
    %1581 = vmatpush2.msra.mxu0 0.0
    %1582 = vmatprep.subr.mxu0 0.0
    %1583 = vmatpush2.msra.mxu0 0.0
    %1584 = vmatprep.subr.mxu0 0.0
    %1585 = vmatpush2.msra.mxu0 0.0
    %1586 = vmatprep.subr.mxu0 0.0
    %1587 = vmatpush2.msra.mxu0 0.0
    %1588 = vmatprep.subr.mxu0 0.0
    %1589 = vmatpush2.msra.mxu0 0.0
    %1590 = vmatprep.subr.mxu0 0.0
    %1591 = vmatpush2.msra.mxu0 0.0
    %1592 = vmatprep.subr.mxu0 0.0
    %1593 = vmatpush2.msra.mxu0 0.0
    %1594 = vmatprep.subr.mxu0 0.0
    %1595 = vmatpush2.msra.mxu0 0.0
    %1596 = vmatprep.subr.mxu0 0.0
    %1597 = vmatpush2.msra.mxu0 0.0
    %1598 = vmatprep.subr.mxu0 0.0
    %1599 = vmatpush2.msra.mxu0 0.0
    %1600 = vmatprep.subr.mxu0 0.0
    %1601 = vmatpush2.msra.mxu0 0.0
    %1602 = vmatprep.subr.mxu0 0.0
    %1603 = vmatpush2.msra.mxu0 0.0
    %1604 = vmatprep.subr.mxu0 0.0
    %1605 = vmatpush2.msra.mxu0 0.0
    %1606 = vmatprep.mubr.f32.mxu0 0.0
    %1607 = vmatmul.mubr.f32.gmra.mxu0 %v1439
    %v1608 = vpop.f32.mrf.mxu0
    %v1609 = vadd.f32 0.0, %v1608
    %v1610 = vpop.f32.mrf.mxu0
    %1611 = vdwg.mxu0
    %v1612 = vadd.f32 %v1541, %v1609
    %v1613 = vxor.u32 %v1612, 2147483648
    %v1614 = vmul.f32 %v1613, 1.442695
    %v1615 = vpow.pop %v1614
    %v1616 = vadd.f32 %v1615, 1.0
    %v1617 = vrcp.pop %v1616
    %v1618 = vmul.f32 1.0, %v1617
    %v1619 = vtanh.pop %v1612
    %v1620 = vmul.f32 %v1618, %v1357
    %1622 = vrot.lane.b32.xlu0 %v1619, 64
    %v1623 = vpop.permute.xlu0 %1622
    %v1625 = vmul.f32 %v1618, %v1623
    %1627 = vrot.lane.b32.xlu0 %v1625, 32
    %v1628 = vpop.permute.xlu0 %1627
    %v1630 = vadd.f32 %v1620, %v1628
    %v1631 = vtanh.pop %v1630
    %1633 = vrot.lane.b32.xlu0 %v1631, 64
    %v1634 = vpop.permute.xlu0 %1633
    %v1636 = vmul.f32 %v1618, %v1634
    %v1637 = vsel %vm86, %v1538, 0
    %1639 = vmatprep.subr.mxu0 0.0
    %1640 = vmatpush1.msra.mxu0 0.0
    %1641 = vmatprep.subr.mxu0 0.0
    %1642 = vmatpush1.msra.mxu0 0.0
    %1643 = vmatprep.subr.mxu0 0.0
    %1644 = vmatpush1.msra.mxu0 0.0
    %1645 = vmatprep.subr.mxu0 0.0
    %1646 = vmatpush1.msra.mxu0 0.0
    %1647 = vmatprep.subr.mxu0 0.0
    %1648 = vmatpush1.msra.mxu0 0.0
    %1649 = vmatprep.subr.mxu0 0.0
    %1650 = vmatpush1.msra.mxu0 0.0
    %1651 = vmatprep.subr.mxu0 0.0
    %1652 = vmatpush1.msra.mxu0 0.0
    %1653 = vmatprep.subr.mxu0 0.0
    %1654 = vmatpush1.msra.mxu0 0.0
    %1655 = vmatprep.subr.mxu0 0.0
    %1656 = vmatpush1.msra.mxu0 0.0
    %1657 = vmatprep.subr.mxu0 0.0
    %1658 = vmatpush1.msra.mxu0 0.0
    %1659 = vmatprep.subr.mxu0 0.0
    %1660 = vmatpush1.msra.mxu0 0.0
    %1661 = vmatprep.subr.mxu0 0.0
    %1662 = vmatpush1.msra.mxu0 0.0
    %1663 = vmatprep.subr.mxu0 0.0
    %1664 = vmatpush1.msra.mxu0 %v172
    %1665 = vmatprep.subr.mxu0 0.0
    %1666 = vmatpush1.msra.mxu0 %v171
    %1667 = vmatprep.subr.mxu0 0.0
    %1668 = vmatpush1.msra.mxu0 %v170
    %1669 = vmatprep.subr.mxu0 0.0
    %1670 = vmatpush1.msra.mxu0 %v169
    %1671 = vmatprep.subr.mxu0 0.0
    %1672 = vmatpush2.msra.mxu0 0.0
    %1673 = vmatprep.subr.mxu0 0.0
    %1674 = vmatpush2.msra.mxu0 0.0
    %1675 = vmatprep.subr.mxu0 0.0
    %1676 = vmatpush2.msra.mxu0 0.0
    %1677 = vmatprep.subr.mxu0 0.0
    %1678 = vmatpush2.msra.mxu0 0.0
    %1679 = vmatprep.subr.mxu0 0.0
    %1680 = vmatpush2.msra.mxu0 0.0
    %1681 = vmatprep.subr.mxu0 0.0
    %1682 = vmatpush2.msra.mxu0 0.0
    %1683 = vmatprep.subr.mxu0 0.0
    %1684 = vmatpush2.msra.mxu0 0.0
    %1685 = vmatprep.subr.mxu0 0.0
    %1686 = vmatpush2.msra.mxu0 0.0
    %1687 = vmatprep.subr.mxu0 0.0
    %1688 = vmatpush2.msra.mxu0 0.0
    %1689 = vmatprep.subr.mxu0 0.0
    %1690 = vmatpush2.msra.mxu0 0.0
    %1691 = vmatprep.subr.mxu0 0.0
    %1692 = vmatpush2.msra.mxu0 0.0
    %1693 = vmatprep.subr.mxu0 0.0
    %1694 = vmatpush2.msra.mxu0 0.0
    %1695 = vmatprep.subr.mxu0 0.0
    %1696 = vmatpush2.msra.mxu0 0.0
    %1697 = vmatprep.subr.mxu0 0.0
    %1698 = vmatpush2.msra.mxu0 0.0
    %1699 = vmatprep.subr.mxu0 0.0
    %1700 = vmatpush2.msra.mxu0 0.0
    %1701 = vmatprep.subr.mxu0 0.0
    %1702 = vmatpush2.msra.mxu0 0.0
    %1703 = vmatprep.mubr.f32.mxu0 0.0
    %1704 = vmatmul.mubr.f32.gmra.mxu0 %v1637
    %v1705 = vpop.f32.mrf.mxu0
    %v1706 = vadd.f32 0.0, %v1705
    %v1707 = vpop.f32.mrf.mxu0
    %1708 = vdwg.mxu0
    %1710 = vrot.lane.b32.xlu0 %v1636, 32
    %v1711 = vpop.permute.xlu0 %1710
    %v1712 = vsel %vm86, %v1711, 0
    %1714 = vmatprep.subr.mxu0 0.0
    %1715 = vmatpush1.msra.mxu0 0.0
    %1716 = vmatprep.subr.mxu0 0.0
    %1717 = vmatpush1.msra.mxu0 0.0
    %1718 = vmatprep.subr.mxu0 0.0
    %1719 = vmatpush1.msra.mxu0 0.0
    %1720 = vmatprep.subr.mxu0 0.0
    %1721 = vmatpush1.msra.mxu0 0.0
    %1722 = vmatprep.subr.mxu0 0.0
    %1723 = vmatpush1.msra.mxu0 0.0
    %1724 = vmatprep.subr.mxu0 0.0
    %1725 = vmatpush1.msra.mxu0 0.0
    %1726 = vmatprep.subr.mxu0 0.0
    %1727 = vmatpush1.msra.mxu0 0.0
    %1728 = vmatprep.subr.mxu0 0.0
    %1729 = vmatpush1.msra.mxu0 0.0
    %1730 = vmatprep.subr.mxu0 0.0
    %1731 = vmatpush1.msra.mxu0 0.0
    %1732 = vmatprep.subr.mxu0 0.0
    %1733 = vmatpush1.msra.mxu0 0.0
    %1734 = vmatprep.subr.mxu0 0.0
    %1735 = vmatpush1.msra.mxu0 0.0
    %1736 = vmatprep.subr.mxu0 0.0
    %1737 = vmatpush1.msra.mxu0 0.0
    %1738 = vmatprep.subr.mxu0 0.0
    %1739 = vmatpush1.msra.mxu0 %v168
    %1740 = vmatprep.subr.mxu0 0.0
    %1741 = vmatpush1.msra.mxu0 %v167
    %1742 = vmatprep.subr.mxu0 0.0
    %1743 = vmatpush1.msra.mxu0 %v166
    %1744 = vmatprep.subr.mxu0 0.0
    %1745 = vmatpush1.msra.mxu0 %v165
    %1746 = vmatprep.subr.mxu0 0.0
    %1747 = vmatpush2.msra.mxu0 0.0
    %1748 = vmatprep.subr.mxu0 0.0
    %1749 = vmatpush2.msra.mxu0 0.0
    %1750 = vmatprep.subr.mxu0 0.0
    %1751 = vmatpush2.msra.mxu0 0.0
    %1752 = vmatprep.subr.mxu0 0.0
    %1753 = vmatpush2.msra.mxu0 0.0
    %1754 = vmatprep.subr.mxu0 0.0
    %1755 = vmatpush2.msra.mxu0 0.0
    %1756 = vmatprep.subr.mxu0 0.0
    %1757 = vmatpush2.msra.mxu0 0.0
    %1758 = vmatprep.subr.mxu0 0.0
    %1759 = vmatpush2.msra.mxu0 0.0
    %1760 = vmatprep.subr.mxu0 0.0
    %1761 = vmatpush2.msra.mxu0 0.0
    %1762 = vmatprep.subr.mxu0 0.0
    %1763 = vmatpush2.msra.mxu0 0.0
    %1764 = vmatprep.subr.mxu0 0.0
    %1765 = vmatpush2.msra.mxu0 0.0
    %1766 = vmatprep.subr.mxu0 0.0
    %1767 = vmatpush2.msra.mxu0 0.0
    %1768 = vmatprep.subr.mxu0 0.0
    %1769 = vmatpush2.msra.mxu0 0.0
    %1770 = vmatprep.subr.mxu0 0.0
    %1771 = vmatpush2.msra.mxu0 0.0
    %1772 = vmatprep.subr.mxu0 0.0
    %1773 = vmatpush2.msra.mxu0 0.0
    %1774 = vmatprep.subr.mxu0 0.0
    %1775 = vmatpush2.msra.mxu0 0.0
    %1776 = vmatprep.subr.mxu0 0.0
    %1777 = vmatpush2.msra.mxu0 0.0
    %1778 = vmatprep.mubr.f32.mxu0 0.0
    %1779 = vmatmul.mubr.f32.gmra.mxu0 %v1712
    %v1780 = vpop.f32.mrf.mxu0
    %v1781 = vadd.f32 %v1706, %v1780
    %v1782 = vpop.f32.mrf.mxu0
    %1783 = vdwg.mxu0
    %v1784 = vadd.f32 %v1781, %v173
    %v1785 = vxor.u32 %v1784, 2147483648
    %v1786 = vmul.f32 %v1785, 1.442695
    %v1787 = vpow.pop %v1786
    %v1788 = vadd.f32 %v1787, 1.0
    %v1789 = vrcp.pop %v1788
    %v1790 = vmul.f32 1.0, %v1789
    %v1791 = vtanh.pop %v1784
    %v1792 = vmul.f32 %v1790, %v1529
    %1794 = vrot.lane.b32.xlu0 %v1791, 64
    %v1795 = vpop.permute.xlu0 %1794
    %v1797 = vmul.f32 %v1790, %v1795
    %1799 = vrot.lane.b32.xlu0 %v1797, 32
    %v1800 = vpop.permute.xlu0 %1799
    %v1802 = vadd.f32 %v1792, %v1800
    %v1803 = vtanh.pop %v1802
    %1805 = vrot.lane.b32.xlu0 %v1803, 64
    %v1806 = vpop.permute.xlu0 %1805
    %v1808 = vmul.f32 %v1790, %v1806
    %1810 = vrot.lane.b32.xlu0 %v1808, 32
    %v1811 = vpop.permute.xlu0 %1810
    %1813 = vst.msk [vmem:[#allocation3 + $0x5] sm:$0x1] %vm447, %v1811
    %v1814 = vld [vmem:[#allocation2 + $0x6] sm:$0x1]
    %1815 = vmatprep.subr.mxu0 0.0
    %1816 = vmatpush1.msra.mxu0 0.0
    %1817 = vmatprep.subr.mxu0 0.0
    %1818 = vmatpush1.msra.mxu0 0.0
    %1819 = vmatprep.subr.mxu0 0.0
    %1820 = vmatpush1.msra.mxu0 0.0
    %1821 = vmatprep.subr.mxu0 0.0
    %1822 = vmatpush1.msra.mxu0 0.0
    %1823 = vmatprep.subr.mxu0 0.0
    %1824 = vmatpush1.msra.mxu0 0.0
    %1825 = vmatprep.subr.mxu0 0.0
    %1826 = vmatpush1.msra.mxu0 0.0
    %1827 = vmatprep.subr.mxu0 0.0
    %1828 = vmatpush1.msra.mxu0 0.0
    %1829 = vmatprep.subr.mxu0 0.0
    %1830 = vmatpush1.msra.mxu0 0.0
    %1831 = vmatprep.subr.mxu0 0.0
    %1832 = vmatpush1.msra.mxu0 0.0
    %1833 = vmatprep.subr.mxu0 0.0
    %1834 = vmatpush1.msra.mxu0 0.0
    %1835 = vmatprep.subr.mxu0 0.0
    %1836 = vmatpush1.msra.mxu0 0.0
    %1837 = vmatprep.subr.mxu0 0.0
    %1838 = vmatpush1.msra.mxu0 0.0
    %1839 = vmatprep.subr.mxu0 0.0
    %1840 = vmatpush1.msra.mxu0 %v164
    %1841 = vmatprep.subr.mxu0 0.0
    %1842 = vmatpush1.msra.mxu0 %v163
    %1843 = vmatprep.subr.mxu0 0.0
    %1844 = vmatpush1.msra.mxu0 %v162
    %1845 = vmatprep.subr.mxu0 0.0
    %1846 = vmatpush1.msra.mxu0 %v161
    %1847 = vmatprep.subr.mxu0 0.0
    %1848 = vmatpush2.msra.mxu0 0.0
    %1849 = vmatprep.subr.mxu0 0.0
    %1850 = vmatpush2.msra.mxu0 0.0
    %1851 = vmatprep.subr.mxu0 0.0
    %1852 = vmatpush2.msra.mxu0 0.0
    %1853 = vmatprep.subr.mxu0 0.0
    %1854 = vmatpush2.msra.mxu0 0.0
    %1855 = vmatprep.subr.mxu0 0.0
    %1856 = vmatpush2.msra.mxu0 0.0
    %1857 = vmatprep.subr.mxu0 0.0
    %1858 = vmatpush2.msra.mxu0 0.0
    %1859 = vmatprep.subr.mxu0 0.0
    %1860 = vmatpush2.msra.mxu0 0.0
    %1861 = vmatprep.subr.mxu0 0.0
    %1862 = vmatpush2.msra.mxu0 0.0
    %1863 = vmatprep.subr.mxu0 0.0
    %1864 = vmatpush2.msra.mxu0 0.0
    %1865 = vmatprep.subr.mxu0 0.0
    %1866 = vmatpush2.msra.mxu0 0.0
    %1867 = vmatprep.subr.mxu0 0.0
    %1868 = vmatpush2.msra.mxu0 0.0
    %1869 = vmatprep.subr.mxu0 0.0
    %1870 = vmatpush2.msra.mxu0 0.0
    %1871 = vmatprep.subr.mxu0 0.0
    %1872 = vmatpush2.msra.mxu0 0.0
    %1873 = vmatprep.subr.mxu0 0.0
    %1874 = vmatpush2.msra.mxu0 0.0
    %1875 = vmatprep.subr.mxu0 0.0
    %1876 = vmatpush2.msra.mxu0 0.0
    %1877 = vmatprep.subr.mxu0 0.0
    %1878 = vmatpush2.msra.mxu0 0.0
    %1879 = vmatprep.mubr.f32.mxu0 0.0
    %1880 = vmatmul.mubr.f32.gmra.mxu0 %v1712
    %v1881 = vpop.f32.mrf.mxu0
    %v1882 = vadd.f32 0.0, %v1881
    %v1883 = vpop.f32.mrf.mxu0
    %1884 = vdwg.mxu0
    %v1885 = vadd.f32 %v1814, %v1882
    %v1886 = vxor.u32 %v1885, 2147483648
    %v1887 = vmul.f32 %v1886, 1.442695
    %v1888 = vpow.pop %v1887
    %v1889 = vadd.f32 %v1888, 1.0
    %v1890 = vrcp.pop %v1889
    %v1891 = vmul.f32 1.0, %v1890
    %v1892 = vtanh.pop %v1885
    %v1893 = vmul.f32 %v1891, %v1630
    %1895 = vrot.lane.b32.xlu0 %v1892, 64
    %v1896 = vpop.permute.xlu0 %1895
    %v1898 = vmul.f32 %v1891, %v1896
    %1900 = vrot.lane.b32.xlu0 %v1898, 32
    %v1901 = vpop.permute.xlu0 %1900
    %v1903 = vadd.f32 %v1893, %v1901
    %v1904 = vtanh.pop %v1903
    %1906 = vrot.lane.b32.xlu0 %v1904, 64
    %v1907 = vpop.permute.xlu0 %1906
    %v1909 = vmul.f32 %v1891, %v1907
    %v1910 = vsel %vm86, %v1811, 0
    %1912 = vmatprep.subr.mxu0 0.0
    %1913 = vmatpush1.msra.mxu0 0.0
    %1914 = vmatprep.subr.mxu0 0.0
    %1915 = vmatpush1.msra.mxu0 0.0
    %1916 = vmatprep.subr.mxu0 0.0
    %1917 = vmatpush1.msra.mxu0 0.0
    %1918 = vmatprep.subr.mxu0 0.0
    %1919 = vmatpush1.msra.mxu0 0.0
    %1920 = vmatprep.subr.mxu0 0.0
    %1921 = vmatpush1.msra.mxu0 0.0
    %1922 = vmatprep.subr.mxu0 0.0
    %1923 = vmatpush1.msra.mxu0 0.0
    %1924 = vmatprep.subr.mxu0 0.0
    %1925 = vmatpush1.msra.mxu0 0.0
    %1926 = vmatprep.subr.mxu0 0.0
    %1927 = vmatpush1.msra.mxu0 0.0
    %1928 = vmatprep.subr.mxu0 0.0
    %1929 = vmatpush1.msra.mxu0 0.0
    %1930 = vmatprep.subr.mxu0 0.0
    %1931 = vmatpush1.msra.mxu0 0.0
    %1932 = vmatprep.subr.mxu0 0.0
    %1933 = vmatpush1.msra.mxu0 0.0
    %1934 = vmatprep.subr.mxu0 0.0
    %1935 = vmatpush1.msra.mxu0 0.0
    %1936 = vmatprep.subr.mxu0 0.0
    %1937 = vmatpush1.msra.mxu0 %v172
    %1938 = vmatprep.subr.mxu0 0.0
    %1939 = vmatpush1.msra.mxu0 %v171
    %1940 = vmatprep.subr.mxu0 0.0
    %1941 = vmatpush1.msra.mxu0 %v170
    %1942 = vmatprep.subr.mxu0 0.0
    %1943 = vmatpush1.msra.mxu0 %v169
    %1944 = vmatprep.subr.mxu0 0.0
    %1945 = vmatpush2.msra.mxu0 0.0
    %1946 = vmatprep.subr.mxu0 0.0
    %1947 = vmatpush2.msra.mxu0 0.0
    %1948 = vmatprep.subr.mxu0 0.0
    %1949 = vmatpush2.msra.mxu0 0.0
    %1950 = vmatprep.subr.mxu0 0.0
    %1951 = vmatpush2.msra.mxu0 0.0
    %1952 = vmatprep.subr.mxu0 0.0
    %1953 = vmatpush2.msra.mxu0 0.0
    %1954 = vmatprep.subr.mxu0 0.0
    %1955 = vmatpush2.msra.mxu0 0.0
    %1956 = vmatprep.subr.mxu0 0.0
    %1957 = vmatpush2.msra.mxu0 0.0
    %1958 = vmatprep.subr.mxu0 0.0
    %1959 = vmatpush2.msra.mxu0 0.0
    %1960 = vmatprep.subr.mxu0 0.0
    %1961 = vmatpush2.msra.mxu0 0.0
    %1962 = vmatprep.subr.mxu0 0.0
    %1963 = vmatpush2.msra.mxu0 0.0
    %1964 = vmatprep.subr.mxu0 0.0
    %1965 = vmatpush2.msra.mxu0 0.0
    %1966 = vmatprep.subr.mxu0 0.0
    %1967 = vmatpush2.msra.mxu0 0.0
    %1968 = vmatprep.subr.mxu0 0.0
    %1969 = vmatpush2.msra.mxu0 0.0
    %1970 = vmatprep.subr.mxu0 0.0
    %1971 = vmatpush2.msra.mxu0 0.0
    %1972 = vmatprep.subr.mxu0 0.0
    %1973 = vmatpush2.msra.mxu0 0.0
    %1974 = vmatprep.subr.mxu0 0.0
    %1975 = vmatpush2.msra.mxu0 0.0
    %1976 = vmatprep.mubr.f32.mxu0 0.0
    %1977 = vmatmul.mubr.f32.gmra.mxu0 %v1910
    %v1978 = vpop.f32.mrf.mxu0
    %v1979 = vadd.f32 0.0, %v1978
    %v1980 = vpop.f32.mrf.mxu0
    %1981 = vdwg.mxu0
    %1983 = vrot.lane.b32.xlu0 %v1909, 32
    %v1984 = vpop.permute.xlu0 %1983
    %v1985 = vsel %vm86, %v1984, 0
    %1987 = vmatprep.subr.mxu0 0.0
    %1988 = vmatpush1.msra.mxu0 0.0
    %1989 = vmatprep.subr.mxu0 0.0
    %1990 = vmatpush1.msra.mxu0 0.0
    %1991 = vmatprep.subr.mxu0 0.0
    %1992 = vmatpush1.msra.mxu0 0.0
    %1993 = vmatprep.subr.mxu0 0.0
    %1994 = vmatpush1.msra.mxu0 0.0
    %1995 = vmatprep.subr.mxu0 0.0
    %1996 = vmatpush1.msra.mxu0 0.0
    %1997 = vmatprep.subr.mxu0 0.0
    %1998 = vmatpush1.msra.mxu0 0.0
    %1999 = vmatprep.subr.mxu0 0.0
    %2000 = vmatpush1.msra.mxu0 0.0
    %2001 = vmatprep.subr.mxu0 0.0
    %2002 = vmatpush1.msra.mxu0 0.0
    %2003 = vmatprep.subr.mxu0 0.0
    %2004 = vmatpush1.msra.mxu0 0.0
    %2005 = vmatprep.subr.mxu0 0.0
    %2006 = vmatpush1.msra.mxu0 0.0
    %2007 = vmatprep.subr.mxu0 0.0
    %2008 = vmatpush1.msra.mxu0 0.0
    %2009 = vmatprep.subr.mxu0 0.0
    %2010 = vmatpush1.msra.mxu0 0.0
    %2011 = vmatprep.subr.mxu0 0.0
    %2012 = vmatpush1.msra.mxu0 %v168
    %2013 = vmatprep.subr.mxu0 0.0
    %2014 = vmatpush1.msra.mxu0 %v167
    %2015 = vmatprep.subr.mxu0 0.0
    %2016 = vmatpush1.msra.mxu0 %v166
    %2017 = vmatprep.subr.mxu0 0.0
    %2018 = vmatpush1.msra.mxu0 %v165
    %2019 = vmatprep.subr.mxu0 0.0
    %2020 = vmatpush2.msra.mxu0 0.0
    %2021 = vmatprep.subr.mxu0 0.0
    %2022 = vmatpush2.msra.mxu0 0.0
    %2023 = vmatprep.subr.mxu0 0.0
    %2024 = vmatpush2.msra.mxu0 0.0
    %2025 = vmatprep.subr.mxu0 0.0
    %2026 = vmatpush2.msra.mxu0 0.0
    %2027 = vmatprep.subr.mxu0 0.0
    %2028 = vmatpush2.msra.mxu0 0.0
    %2029 = vmatprep.subr.mxu0 0.0
    %2030 = vmatpush2.msra.mxu0 0.0
    %2031 = vmatprep.subr.mxu0 0.0
    %2032 = vmatpush2.msra.mxu0 0.0
    %2033 = vmatprep.subr.mxu0 0.0
    %2034 = vmatpush2.msra.mxu0 0.0
    %2035 = vmatprep.subr.mxu0 0.0
    %2036 = vmatpush2.msra.mxu0 0.0
    %2037 = vmatprep.subr.mxu0 0.0
    %2038 = vmatpush2.msra.mxu0 0.0
    %2039 = vmatprep.subr.mxu0 0.0
    %2040 = vmatpush2.msra.mxu0 0.0
    %2041 = vmatprep.subr.mxu0 0.0
    %2042 = vmatpush2.msra.mxu0 0.0
    %2043 = vmatprep.subr.mxu0 0.0
    %2044 = vmatpush2.msra.mxu0 0.0
    %2045 = vmatprep.subr.mxu0 0.0
    %2046 = vmatpush2.msra.mxu0 0.0
    %2047 = vmatprep.subr.mxu0 0.0
    %2048 = vmatpush2.msra.mxu0 0.0
    %2049 = vmatprep.subr.mxu0 0.0
    %2050 = vmatpush2.msra.mxu0 0.0
    %2051 = vmatprep.mubr.f32.mxu0 0.0
    %2052 = vmatmul.mubr.f32.gmra.mxu0 %v1985
    %v2053 = vpop.f32.mrf.mxu0
    %v2054 = vadd.f32 %v1979, %v2053
    %v2055 = vpop.f32.mrf.mxu0
    %2056 = vdwg.mxu0
    %v2057 = vadd.f32 %v2054, %v173
    %v2058 = vxor.u32 %v2057, 2147483648
    %v2059 = vmul.f32 %v2058, 1.442695
    %v2060 = vpow.pop %v2059
    %v2061 = vadd.f32 %v2060, 1.0
    %v2062 = vrcp.pop %v2061
    %v2063 = vmul.f32 1.0, %v2062
    %v2064 = vtanh.pop %v2057
    %v2065 = vmul.f32 %v2063, %v1802
    %2067 = vrot.lane.b32.xlu0 %v2064, 64
    %v2068 = vpop.permute.xlu0 %2067
    %v2070 = vmul.f32 %v2063, %v2068
    %2072 = vrot.lane.b32.xlu0 %v2070, 32
    %v2073 = vpop.permute.xlu0 %2072
    %v2075 = vadd.f32 %v2065, %v2073
    %v2076 = vtanh.pop %v2075
    %2078 = vrot.lane.b32.xlu0 %v2076, 64
    %v2079 = vpop.permute.xlu0 %2078
    %v2081 = vmul.f32 %v2063, %v2079
    %2083 = vrot.lane.b32.xlu0 %v2081, 32
    %v2084 = vpop.permute.xlu0 %2083
    %2086 = vst.msk [vmem:[#allocation3 + $0x6] sm:$0x1] %vm447, %v2084
    %v2087 = vld [vmem:[#allocation2 + $0x7] sm:$0x1]
    %2088 = vmatprep.subr.mxu0 0.0
    %2089 = vmatpush1.msra.mxu0 0.0
    %2090 = vmatprep.subr.mxu0 0.0
    %2091 = vmatpush1.msra.mxu0 0.0
    %2092 = vmatprep.subr.mxu0 0.0
    %2093 = vmatpush1.msra.mxu0 0.0
    %2094 = vmatprep.subr.mxu0 0.0
    %2095 = vmatpush1.msra.mxu0 0.0
    %2096 = vmatprep.subr.mxu0 0.0
    %2097 = vmatpush1.msra.mxu0 0.0
    %2098 = vmatprep.subr.mxu0 0.0
    %2099 = vmatpush1.msra.mxu0 0.0
    %2100 = vmatprep.subr.mxu0 0.0
    %2101 = vmatpush1.msra.mxu0 0.0
    %2102 = vmatprep.subr.mxu0 0.0
    %2103 = vmatpush1.msra.mxu0 0.0
    %2104 = vmatprep.subr.mxu0 0.0
    %2105 = vmatpush1.msra.mxu0 0.0
    %2106 = vmatprep.subr.mxu0 0.0
    %2107 = vmatpush1.msra.mxu0 0.0
    %2108 = vmatprep.subr.mxu0 0.0
    %2109 = vmatpush1.msra.mxu0 0.0
    %2110 = vmatprep.subr.mxu0 0.0
    %2111 = vmatpush1.msra.mxu0 0.0
    %2112 = vmatprep.subr.mxu0 0.0
    %2113 = vmatpush1.msra.mxu0 %v164
    %2114 = vmatprep.subr.mxu0 0.0
    %2115 = vmatpush1.msra.mxu0 %v163
    %2116 = vmatprep.subr.mxu0 0.0
    %2117 = vmatpush1.msra.mxu0 %v162
    %2118 = vmatprep.subr.mxu0 0.0
    %2119 = vmatpush1.msra.mxu0 %v161
    %2120 = vmatprep.subr.mxu0 0.0
    %2121 = vmatpush2.msra.mxu0 0.0
    %2122 = vmatprep.subr.mxu0 0.0
    %2123 = vmatpush2.msra.mxu0 0.0
    %2124 = vmatprep.subr.mxu0 0.0
    %2125 = vmatpush2.msra.mxu0 0.0
    %2126 = vmatprep.subr.mxu0 0.0
    %2127 = vmatpush2.msra.mxu0 0.0
    %2128 = vmatprep.subr.mxu0 0.0
    %2129 = vmatpush2.msra.mxu0 0.0
    %2130 = vmatprep.subr.mxu0 0.0
    %2131 = vmatpush2.msra.mxu0 0.0
    %2132 = vmatprep.subr.mxu0 0.0
    %2133 = vmatpush2.msra.mxu0 0.0
    %2134 = vmatprep.subr.mxu0 0.0
    %2135 = vmatpush2.msra.mxu0 0.0
    %2136 = vmatprep.subr.mxu0 0.0
    %2137 = vmatpush2.msra.mxu0 0.0
    %2138 = vmatprep.subr.mxu0 0.0
    %2139 = vmatpush2.msra.mxu0 0.0
    %2140 = vmatprep.subr.mxu0 0.0
    %2141 = vmatpush2.msra.mxu0 0.0
    %2142 = vmatprep.subr.mxu0 0.0
    %2143 = vmatpush2.msra.mxu0 0.0
    %2144 = vmatprep.subr.mxu0 0.0
    %2145 = vmatpush2.msra.mxu0 0.0
    %2146 = vmatprep.subr.mxu0 0.0
    %2147 = vmatpush2.msra.mxu0 0.0
    %2148 = vmatprep.subr.mxu0 0.0
    %2149 = vmatpush2.msra.mxu0 0.0
    %2150 = vmatprep.subr.mxu0 0.0
    %2151 = vmatpush2.msra.mxu0 0.0
    %2152 = vmatprep.mubr.f32.mxu0 0.0
    %2153 = vmatmul.mubr.f32.gmra.mxu0 %v1985
    %v2154 = vpop.f32.mrf.mxu0
    %v2155 = vadd.f32 0.0, %v2154
    %v2156 = vpop.f32.mrf.mxu0
    %2157 = vdwg.mxu0
    %v2158 = vadd.f32 %v2087, %v2155
    %v2159 = vxor.u32 %v2158, 2147483648
    %v2160 = vmul.f32 %v2159, 1.442695
    %v2161 = vpow.pop %v2160
    %v2162 = vadd.f32 %v2161, 1.0
    %v2163 = vrcp.pop %v2162
    %v2164 = vmul.f32 1.0, %v2163
    %v2165 = vtanh.pop %v2158
    %v2166 = vmul.f32 %v2164, %v1903
    %2168 = vrot.lane.b32.xlu0 %v2165, 64
    %v2169 = vpop.permute.xlu0 %2168
    %v2171 = vmul.f32 %v2164, %v2169
    %2173 = vrot.lane.b32.xlu0 %v2171, 32
    %v2174 = vpop.permute.xlu0 %2173
    %v2176 = vadd.f32 %v2166, %v2174
    %v2177 = vtanh.pop %v2176
    %2179 = vrot.lane.b32.xlu0 %v2177, 64
    %v2180 = vpop.permute.xlu0 %2179
    %v2182 = vmul.f32 %v2164, %v2180
    %v2183 = vsel %vm86, %v2084, 0
    %2185 = vmatprep.subr.mxu0 0.0
    %2186 = vmatpush1.msra.mxu0 0.0
    %2187 = vmatprep.subr.mxu0 0.0
    %2188 = vmatpush1.msra.mxu0 0.0
    %2189 = vmatprep.subr.mxu0 0.0
    %2190 = vmatpush1.msra.mxu0 0.0
    %2191 = vmatprep.subr.mxu0 0.0
    %2192 = vmatpush1.msra.mxu0 0.0
    %2193 = vmatprep.subr.mxu0 0.0
    %2194 = vmatpush1.msra.mxu0 0.0
    %2195 = vmatprep.subr.mxu0 0.0
    %2196 = vmatpush1.msra.mxu0 0.0
    %2197 = vmatprep.subr.mxu0 0.0
    %2198 = vmatpush1.msra.mxu0 0.0
    %2199 = vmatprep.subr.mxu0 0.0
    %2200 = vmatpush1.msra.mxu0 0.0
    %2201 = vmatprep.subr.mxu0 0.0
    %2202 = vmatpush1.msra.mxu0 0.0
    %2203 = vmatprep.subr.mxu0 0.0
    %2204 = vmatpush1.msra.mxu0 0.0
    %2205 = vmatprep.subr.mxu0 0.0
    %2206 = vmatpush1.msra.mxu0 0.0
    %2207 = vmatprep.subr.mxu0 0.0
    %2208 = vmatpush1.msra.mxu0 0.0
    %2209 = vmatprep.subr.mxu0 0.0
    %2210 = vmatpush1.msra.mxu0 %v172
    %2211 = vmatprep.subr.mxu0 0.0
    %2212 = vmatpush1.msra.mxu0 %v171
    %2213 = vmatprep.subr.mxu0 0.0
    %2214 = vmatpush1.msra.mxu0 %v170
    %2215 = vmatprep.subr.mxu0 0.0
    %2216 = vmatpush1.msra.mxu0 %v169
    %2217 = vmatprep.subr.mxu0 0.0
    %2218 = vmatpush2.msra.mxu0 0.0
    %2219 = vmatprep.subr.mxu0 0.0
    %2220 = vmatpush2.msra.mxu0 0.0
    %2221 = vmatprep.subr.mxu0 0.0
    %2222 = vmatpush2.msra.mxu0 0.0
    %2223 = vmatprep.subr.mxu0 0.0
    %2224 = vmatpush2.msra.mxu0 0.0
    %2225 = vmatprep.subr.mxu0 0.0
    %2226 = vmatpush2.msra.mxu0 0.0
    %2227 = vmatprep.subr.mxu0 0.0
    %2228 = vmatpush2.msra.mxu0 0.0
    %2229 = vmatprep.subr.mxu0 0.0
    %2230 = vmatpush2.msra.mxu0 0.0
    %2231 = vmatprep.subr.mxu0 0.0
    %2232 = vmatpush2.msra.mxu0 0.0
    %2233 = vmatprep.subr.mxu0 0.0
    %2234 = vmatpush2.msra.mxu0 0.0
    %2235 = vmatprep.subr.mxu0 0.0
    %2236 = vmatpush2.msra.mxu0 0.0
    %2237 = vmatprep.subr.mxu0 0.0
    %2238 = vmatpush2.msra.mxu0 0.0
    %2239 = vmatprep.subr.mxu0 0.0
    %2240 = vmatpush2.msra.mxu0 0.0
    %2241 = vmatprep.subr.mxu0 0.0
    %2242 = vmatpush2.msra.mxu0 0.0
    %2243 = vmatprep.subr.mxu0 0.0
    %2244 = vmatpush2.msra.mxu0 0.0
    %2245 = vmatprep.subr.mxu0 0.0
    %2246 = vmatpush2.msra.mxu0 0.0
    %2247 = vmatprep.subr.mxu0 0.0
    %2248 = vmatpush2.msra.mxu0 0.0
    %2249 = vmatprep.mubr.f32.mxu0 0.0
    %2250 = vmatmul.mubr.f32.gmra.mxu0 %v2183
    %v2251 = vpop.f32.mrf.mxu0
    %v2252 = vadd.f32 0.0, %v2251
    %v2253 = vpop.f32.mrf.mxu0
    %2254 = vdwg.mxu0
    %2256 = vrot.lane.b32.xlu0 %v2182, 32
    %v2257 = vpop.permute.xlu0 %2256
    %v2258 = vsel %vm86, %v2257, 0
    %2260 = vmatprep.subr.mxu0 0.0
    %2261 = vmatpush1.msra.mxu0 0.0
    %2262 = vmatprep.subr.mxu0 0.0
    %2263 = vmatpush1.msra.mxu0 0.0
    %2264 = vmatprep.subr.mxu0 0.0
    %2265 = vmatpush1.msra.mxu0 0.0
    %2266 = vmatprep.subr.mxu0 0.0
    %2267 = vmatpush1.msra.mxu0 0.0
    %2268 = vmatprep.subr.mxu0 0.0
    %2269 = vmatpush1.msra.mxu0 0.0
    %2270 = vmatprep.subr.mxu0 0.0
    %2271 = vmatpush1.msra.mxu0 0.0
    %2272 = vmatprep.subr.mxu0 0.0
    %2273 = vmatpush1.msra.mxu0 0.0
    %2274 = vmatprep.subr.mxu0 0.0
    %2275 = vmatpush1.msra.mxu0 0.0
    %2276 = vmatprep.subr.mxu0 0.0
    %2277 = vmatpush1.msra.mxu0 0.0
    %2278 = vmatprep.subr.mxu0 0.0
    %2279 = vmatpush1.msra.mxu0 0.0
    %2280 = vmatprep.subr.mxu0 0.0
    %2281 = vmatpush1.msra.mxu0 0.0
    %2282 = vmatprep.subr.mxu0 0.0
    %2283 = vmatpush1.msra.mxu0 0.0
    %2284 = vmatprep.subr.mxu0 0.0
    %2285 = vmatpush1.msra.mxu0 %v168
    %2286 = vmatprep.subr.mxu0 0.0
    %2287 = vmatpush1.msra.mxu0 %v167
    %2288 = vmatprep.subr.mxu0 0.0
    %2289 = vmatpush1.msra.mxu0 %v166
    %2290 = vmatprep.subr.mxu0 0.0
    %2291 = vmatpush1.msra.mxu0 %v165
    %2292 = vmatprep.subr.mxu0 0.0
    %2293 = vmatpush2.msra.mxu0 0.0
    %2294 = vmatprep.subr.mxu0 0.0
    %2295 = vmatpush2.msra.mxu0 0.0
    %2296 = vmatprep.subr.mxu0 0.0
    %2297 = vmatpush2.msra.mxu0 0.0
    %2298 = vmatprep.subr.mxu0 0.0
    %2299 = vmatpush2.msra.mxu0 0.0
    %2300 = vmatprep.subr.mxu0 0.0
    %2301 = vmatpush2.msra.mxu0 0.0
    %2302 = vmatprep.subr.mxu0 0.0
    %2303 = vmatpush2.msra.mxu0 0.0
    %2304 = vmatprep.subr.mxu0 0.0
    %2305 = vmatpush2.msra.mxu0 0.0
    %2306 = vmatprep.subr.mxu0 0.0
    %2307 = vmatpush2.msra.mxu0 0.0
    %2308 = vmatprep.subr.mxu0 0.0
    %2309 = vmatpush2.msra.mxu0 0.0
    %2310 = vmatprep.subr.mxu0 0.0
    %2311 = vmatpush2.msra.mxu0 0.0
    %2312 = vmatprep.subr.mxu0 0.0
    %2313 = vmatpush2.msra.mxu0 0.0
    %2314 = vmatprep.subr.mxu0 0.0
    %2315 = vmatpush2.msra.mxu0 0.0
    %2316 = vmatprep.subr.mxu0 0.0
    %2317 = vmatpush2.msra.mxu0 0.0
    %2318 = vmatprep.subr.mxu0 0.0
    %2319 = vmatpush2.msra.mxu0 0.0
    %2320 = vmatprep.subr.mxu0 0.0
    %2321 = vmatpush2.msra.mxu0 0.0
    %2322 = vmatprep.subr.mxu0 0.0
    %2323 = vmatpush2.msra.mxu0 0.0
    %2324 = vmatprep.mubr.f32.mxu0 0.0
    %2325 = vmatmul.mubr.f32.gmra.mxu0 %v2258
    %v2326 = vpop.f32.mrf.mxu0
    %v2327 = vadd.f32 %v2252, %v2326
    %v2328 = vpop.f32.mrf.mxu0
    %2329 = vdwg.mxu0
    %v2330 = vadd.f32 %v2327, %v173
    %v2331 = vxor.u32 %v2330, 2147483648
    %v2332 = vmul.f32 %v2331, 1.442695
    %v2333 = vpow.pop %v2332
    %v2334 = vadd.f32 %v2333, 1.0
    %v2335 = vrcp.pop %v2334
    %v2336 = vmul.f32 1.0, %v2335
    %v2337 = vtanh.pop %v2330
    %v2338 = vmul.f32 %v2336, %v2075
    %2340 = vrot.lane.b32.xlu0 %v2337, 64
    %v2341 = vpop.permute.xlu0 %2340
    %v2343 = vmul.f32 %v2336, %v2341
    %2345 = vrot.lane.b32.xlu0 %v2343, 32
    %v2346 = vpop.permute.xlu0 %2345
    %v2348 = vadd.f32 %v2338, %v2346
    %v2349 = vtanh.pop %v2348
    %2351 = vrot.lane.b32.xlu0 %v2349, 64
    %v2352 = vpop.permute.xlu0 %2351
    %v2354 = vmul.f32 %v2336, %v2352
    %2356 = vrot.lane.b32.xlu0 %v2354, 32
    %v2357 = vpop.permute.xlu0 %2356
    %2359 = vst.msk [vmem:[#allocation3 + $0x7] sm:$0x1] %vm447, %v2357
    %v2360 = vld [vmem:[#allocation3] sm:$0xff]
    %v2361 = vld [vmem:[%s7] sm:$0xff]
    %v2362 = vld [vmem:[%s7 + $0x8] sm:$0xff]
    %v2363 = vld [vmem:[%s7 + $0x10] sm:$0xff]
    %v2364 = vld [vmem:[%s7 + $0x18] sm:$0xff]
    %v2365 = vld [vmem:[%s8] sm:$0x1]
    %v2367 = vlaneseq
    %v2368 = vshrl.u32 %v2367, 7
    %v2369 = vsub.s32 0, %v2368
    %v2370 = vrot.slane %v2365, %v2369
    %v2373 = vsel %vm86, %v2360, 0
    %2375 = vmatprep.subr.mxu0 0.0
    %2376 = vmatpush1.msra.mxu0 0.0
    %2377 = vmatprep.subr.mxu0 0.0
    %2378 = vmatpush1.msra.mxu0 0.0
    %2379 = vmatprep.subr.mxu0 0.0
    %2380 = vmatpush1.msra.mxu0 0.0
    %2381 = vmatprep.subr.mxu0 0.0
    %2382 = vmatpush1.msra.mxu0 0.0
    %2383 = vmatprep.subr.mxu0 0.0
    %2384 = vmatpush1.msra.mxu0 0.0
    %2385 = vmatprep.subr.mxu0 0.0
    %2386 = vmatpush1.msra.mxu0 0.0
    %2387 = vmatprep.subr.mxu0 0.0
    %2388 = vmatpush1.msra.mxu0 0.0
    %2389 = vmatprep.subr.mxu0 0.0
    %2390 = vmatpush1.msra.mxu0 0.0
    %2391 = vmatprep.subr.mxu0 0.0
    %2392 = vmatpush1.msra.mxu0 0.0
    %2393 = vmatprep.subr.mxu0 0.0
    %2394 = vmatpush1.msra.mxu0 0.0
    %2395 = vmatprep.subr.mxu0 0.0
    %2396 = vmatpush1.msra.mxu0 0.0
    %2397 = vmatprep.subr.mxu0 0.0
    %2398 = vmatpush1.msra.mxu0 0.0
    %2399 = vmatprep.subr.mxu0 0.0
    %2400 = vmatpush1.msra.mxu0 %v2364
    %2401 = vmatprep.subr.mxu0 0.0
    %2402 = vmatpush1.msra.mxu0 %v2363
    %2403 = vmatprep.subr.mxu0 0.0
    %2404 = vmatpush1.msra.mxu0 %v2362
    %2405 = vmatprep.subr.mxu0 0.0
    %2406 = vmatpush1.msra.mxu0 %v2361
    %2407 = vmatprep.subr.mxu0 0.0
    %2408 = vmatpush2.msra.mxu0 0.0
    %2409 = vmatprep.subr.mxu0 0.0
    %2410 = vmatpush2.msra.mxu0 0.0
    %2411 = vmatprep.subr.mxu0 0.0
    %2412 = vmatpush2.msra.mxu0 0.0
    %2413 = vmatprep.subr.mxu0 0.0
    %2414 = vmatpush2.msra.mxu0 0.0
    %2415 = vmatprep.subr.mxu0 0.0
    %2416 = vmatpush2.msra.mxu0 0.0
    %2417 = vmatprep.subr.mxu0 0.0
    %2418 = vmatpush2.msra.mxu0 0.0
    %2419 = vmatprep.subr.mxu0 0.0
    %2420 = vmatpush2.msra.mxu0 0.0
    %2421 = vmatprep.subr.mxu0 0.0
    %2422 = vmatpush2.msra.mxu0 0.0
    %2423 = vmatprep.subr.mxu0 0.0
    %2424 = vmatpush2.msra.mxu0 0.0
    %2425 = vmatprep.subr.mxu0 0.0
    %2426 = vmatpush2.msra.mxu0 0.0
    %2427 = vmatprep.subr.mxu0 0.0
    %2428 = vmatpush2.msra.mxu0 0.0
    %2429 = vmatprep.subr.mxu0 0.0
    %2430 = vmatpush2.msra.mxu0 0.0
    %2431 = vmatprep.subr.mxu0 0.0
    %2432 = vmatpush2.msra.mxu0 0.0
    %2433 = vmatprep.subr.mxu0 0.0
    %2434 = vmatpush2.msra.mxu0 0.0
    %2435 = vmatprep.subr.mxu0 0.0
    %2436 = vmatpush2.msra.mxu0 0.0
    %2437 = vmatprep.subr.mxu0 0.0
    %2438 = vmatpush2.msra.mxu0 0.0
    %2439 = vmatprep.mubr.f32.mxu0 0.0
    %2440 = vmatmul.mubr.f32.gmra.mxu0 %v2373
    %v2441 = vpop.f32.mrf.mxu0
    %v2442 = vadd.f32 %v2370, %v2441
    %v2443 = vpop.f32.mrf.mxu0
    %2444 = vdwg.mxu0
    %vm2445 = vcmask 64512
    %v2446 = vsel %vm2445, %v2442, -inf
    %2447 = vmax.xlane.f32.xlu0 %v2446
    %v2448 = vpop.xlane.xlu0 %2447
    %v2449 = vsub.f32 %v2442, %v2448
    %v2450 = vmul.f32 %v2449, 1.442695
    %v2451 = vpow.pop %v2450
    %v2452 = vsel %vm2445, %v2451, 0.0
    %2453 = vadd.xlane.f32.xlu0 %v2452
    %v2454 = vpop.xlane.xlu0 %2453
    %v2455 = vlog2.pop %v2454
    %v2456 = vmul.f32 %v2455, 0.6931472
    %v2457 = vadd.f32 %v2448, %v2456
    %v2458 = vsub.f32 %v2442, %v2457
    %2459 = vst.msk [vmem:[#allocation10] sm:$0xff] %vm2445, %v2458
    // Predicated region
    $region50: #{tpu_custom_call.1} parent=1 // pred_check
      _
    $region51: #{tpu_custom_call.1} parent=1 // pred_check_branch
      %2461 = sbr.rel (0) target = $region53
    $region52: #{tpu_custom_call.1} parent=1 // pred_region
      %s2463 = ssub.s32 128, 128
      %2464 = vsyncadd [#allocation6], %s2463
      %s2466 = sshll.u32 [#allocation10], 4
      %s2467 = int_to_ptr.vmem [resolvable:$true] %s2466
      %2469 = dma.vmem_to_hbm [thread:$0]  %s2467, 128, %s9, [#allocation6]
    $region53: #{tpu_custom_call.1} parent=1 // pred_fallthru
      _
    // Predicated region
    $region54: #{tpu_custom_call.1} parent=1 // pred_check
      _
    $region55: #{tpu_custom_call.1} parent=1 // pred_check_branch
      %2471 = sbr.rel (0) target = $region57
    $region56: #{tpu_custom_call.1} parent=1 // pred_region
      %2472 = dma.done [#allocation6], 128
    $region57: #{tpu_custom_call.1} parent=1 // pred_fallthru
      _
    %2473 = vsyncpa [#allocation5], 1
    %2474 = vsyncpa [#allocation8], 1
    %2475 = vsyncpa [#allocation6], 1

</llo_original>
